<compile_context>
chip_gen: v7x
topology: tpu7x:2x2x1
jax: 0.10.0
libtpu: 0.0.40
codegen_flags: <defaults>
</compile_context>

<pallas_src>
import jax
import jax.numpy as jnp
from jax import lax
from jax.experimental import pallas as pl
from jax.experimental.pallas import tpu as pltpu


def attention_kernel(h_ref, vt_ref, bseg_ref, b_ref, o_ref):
    """Fused relation-attention over one lane-packed row tile.

    h_ref    [R, T, L]  VMEM   L = P*F lanes; each physical row packs P original rows
    vt_ref   [R, P, L]  VMEM   vt[r, j, :] = v_r placed in lane segment j (zeros elsewhere)
    bseg_ref [P, L]     VMEM   0/1 indicator: bseg[j, l] = 1 iff l // F == j
    b_ref    [R]        SMEM   per-relation scoring bias
    o_ref    [T, L]     VMEM   packed output tile
    """
    R = h_ref.shape[0]
    bseg = bseg_ref[...]                                # [P, L], loaded once

    hs, exps = [], []
    denom = None
    for r in range(R):                                  # R is small & static -> unrolled
        hr = h_ref[r]                                   # [T, L] f32, dense 128-lane load
        hs.append(hr)
        # Segmented score: s[t, j] = sum_f h[t, j*F + f] * v_r[f]  (one MXU NT matmul).
        s = lax.dot_general(hr, vt_ref[r],
                            dimension_numbers=(((1,), (1,)), ((), ())),
                            preferred_element_type=jnp.float32)    # [T, P]
        s = s + b_ref[r]
        # tanh bounds the logit to [-1, 1] -> exp cannot overflow; skip max-subtraction.
        e = jnp.exp(jnp.tanh(s))                        # [T, P]
        exps.append(e)
        denom = e if denom is None else denom + e

    # Single exact reciprocal shared by all relations ([T, P] is tiny).
    inv = pl.reciprocal(denom, approx=False)            # [T, P]

    out = None
    for r in range(R):
        # Broadcast each packed row's weight across its F-lane segment with a tiny
        # MXU matmul against the 0/1 indicator, then one dense VPU FMA per relation.
        w_full = jnp.dot(exps[r] * inv, bseg,
                         preferred_element_type=jnp.float32)       # [T, L]
        contrib = w_full * hs[r]
        out = contrib if out is None else out + contrib

    o_ref[...] = out.astype(o_ref.dtype)                # dense, unmasked 128-lane store


def attention_forward(h, w, y, b, *, tile_rows=8192):
    """h: [R, N, F], w: [R, F, F] (pre-transposed so h @ W == torch Linear(h)),
    y: [R, F], b: [1, R].  Returns [N, F]."""
    R, N, F = h.shape
    h = h.astype(jnp.float32)

    # Algebraic fold: (h @ W_r) @ y_r == h @ (W_r @ y_r) -> kernel never sees W.
    v = jnp.einsum("rfg,rg->rf", w, y).astype(jnp.float32)          # [R, F]
    b_vec = jnp.reshape(b, (R,)).astype(jnp.float32)                 # [R] -> SMEM

    # Lane-dense packing: view P = 128 // F consecutive rows as one 128-lane row.
    P = 128 // F if (F < 128 and 128 % F == 0) else 1
    L = P * F
    pad = (-N) % (8 * P)              # keep packed row count a multiple of 8 (sublanes)
    if pad:
        h = jnp.pad(h, ((0, 0), (0, pad), (0, 0)))
    Np = N + pad
    NP = Np // P                      # packed rows
    hp = jnp.reshape(h, (R, NP, L))   # free row-major reshape (contiguous)

    eyeP = jnp.eye(P, dtype=jnp.float32)
    # vt[r, j, j*F:(j+1)*F] = v[r]; zeros elsewhere  -> score-matmul operand.
    vt = (eyeP[None, :, :, None] * v[:, None, None, :]).reshape(R, P, L)
    # bseg[j, l] = 1 iff l // F == j                 -> weight-broadcast operand.
    bseg = jnp.repeat(eyeP, F, axis=1)                                # [P, L]

    # Tiling: large tiles (amortize ~0.35us per grid step) but always >= 2 steps so
    # the "parallel" axis splits across v7x's 2 TensorCores; <= ~3 MiB per h buffer.
    max_t = max(8, tile_rows // P)
    steps = max(2, pl.cdiv(NP, max_t))
    steps = steps + (steps % 2)                       # even step count for the 2-TC split
    T = min(NP, ((pl.cdiv(NP, steps) + 7) // 8) * 8)  # multiple of 8 sublanes
    grid = (pl.cdiv(NP, T),)

    cost = pl.CostEstimate(
        flops=2 * R * N * (F + P) + 6 * R * N,
        transcendentals=2 * R * N + N,
        bytes_accessed=4 * (R * Np * F + Np * F + R * P * L + P * L + R),
    )

    out_p = pl.pallas_call(
        attention_kernel,
        out_shape=jax.ShapeDtypeStruct((NP, L), jnp.float32),
        grid_spec=pltpu.PrefetchScalarGridSpec(
            num_scalar_prefetch=0,
            grid=grid,
            in_specs=[
                pl.BlockSpec((R, T, L), lambda i: (0, i, 0)),          # packed h tile
                pl.BlockSpec((R, P, L), lambda i: (0, 0, 0)),          # vt resident
                pl.BlockSpec((P, L), lambda i: (0, 0)),                # bseg resident
                pl.BlockSpec(memory_space=pltpu.MemorySpace.SMEM),     # bias scalars
            ],
            out_specs=pl.BlockSpec((T, L), lambda i: (i, 0)),
        ),
        compiler_params=pltpu.CompilerParams(
            dimension_semantics=("parallel",),     # rows split across v7x's 2 TCs
            vmem_limit_bytes=32 * 1024 * 1024,     # conservative vs v7x's 64 MiB VMEM
        ),
        cost_estimate=cost,
    )(hp, vt, bseg, b_vec)

    out = jnp.reshape(out_p, (Np, F))
    return out[:N] if pad else out


def reference_forward(h, w, y, b):
    """Pure-JAX reference matching the PyTorch forward (unfolded, unpacked)."""
    proj = jnp.einsum("rnf,rfg->rng", h, w)
    s = jnp.einsum("rng,rg->nr", proj, y) + b             # [N, R]
    score = jax.nn.softmax(jnp.tanh(s), axis=-1)          # [N, R]
    return jnp.einsum("nr,rnf->nf", score, h)             # [N, F]


def xavier_uniform(key, shape, fan_in, fan_out, dtype=jnp.float32):
    bound = (6.0 / (fan_in + fan_out)) ** 0.5
    return jax.random.uniform(key, shape, dtype=dtype, minval=-bound, maxval=bound)


if __name__ == "__main__":
    rel_size = 3     # number of relations (len(h_list))
    in_ft = 32       # feature dim
    N = 1024         # rows/nodes per relation (exercises packing + 2-step grid)

    key = jax.random.PRNGKey(0)
    k_h, k_w, k_y = jax.random.split(key, 3)

    # Inputs: h_list stacked -> [R, N, F]
    h = jax.random.normal(k_h, (rel_size, N, in_ft), dtype=jnp.float32)

    # Deterministic xavier_uniform init like the PyTorch module, bias = 0.
    # w_list[i].weight is [F, F]; stored transposed so the math is h @ W.
    w_keys = jax.random.split(k_w, rel_size)
    w = jnp.stack(
        [xavier_uniform(w_keys[i], (in_ft, in_ft), in_ft, in_ft).T for i in range(rel_size)],
        axis=0,
    )  # [R, F, F]

    # y_list[i].weight is [1, F]; store as [R, F]. Bias -> zeros [1, R].
    y_keys = jax.random.split(k_y, rel_size)
    y = jnp.stack(
        [xavier_uniform(y_keys[i], (1, in_ft), in_ft, 1)[0] for i in range(rel_size)],
        axis=0,
    )  # [R, F]
    b = jnp.zeros((1, rel_size), dtype=jnp.float32)

    out = jax.block_until_ready(attention_forward(h, w, y, b))
    ref = reference_forward(h, w, y, b)

    assert out.shape == (N, in_ft)
    # The W@y fold and the packed-score matmuls only reassociate f32 reductions
    # (~1e-6 numerically); the tanh-bounded softmax needs no max-subtraction.
    assert jnp.allclose(out, ref, atol=1e-4, rtol=1e-4), "Pallas output mismatch vs reference"

    print("KERNEL_OK")
</pallas_src>

<mosaic_0001>
module attributes {stable_mosaic.version = 11 : i64} {
  func.func @attention_kernel(%arg0: i32, %arg1: memref<3x128x128xf32, #tpu.memory_space<vmem>>, %arg2: memref<3x4x128xf32, #tpu.memory_space<vmem>>, %arg3: memref<4x128xf32, #tpu.memory_space<vmem>>, %arg4: memref<3xf32, #tpu.memory_space<smem>>, %arg5: memref<128x128xf32, #tpu.memory_space<vmem>>) attributes {dimension_semantics = [#tpu.dimension_semantics<parallel>], iteration_bounds = array<i64: 2>, scalar_prefetch = 0 : i64, scratch_operands = 0 : i64, tpu.core_type = #tpu.core_type<tc>, window_params = [{transform_indices = @transform_0, window_bounds = array<i64: 3, 128, 128>}, {pipeline_mode = #tpu.pipeline_mode<synchronous>, transform_indices = @transform_1, window_bounds = array<i64: 3, 4, 128>}, {pipeline_mode = #tpu.pipeline_mode<synchronous>, transform_indices = @transform_2, window_bounds = array<i64: 4, 128>}, {transform_indices = @transform_3, window_bounds = array<i64: 3>}, {transform_indices = @transform_4, window_bounds = array<i64: 128, 128>}]} {
    %c0 = arith.constant 0 : index
    %c0_0 = arith.constant 0 : index
    %0 = vector.load %arg3[%c0, %c0_0] : memref<4x128xf32, #tpu.memory_space<vmem>>, vector<4x128xf32>
    %c0_1 = arith.constant 0 : index
    %c0_2 = arith.constant 0 : index
    %c0_3 = arith.constant 0 : index
    %1 = vector.load %arg1[%c0_1, %c0_2, %c0_3] : memref<3x128x128xf32, #tpu.memory_space<vmem>>, vector<1x128x128xf32>
    %2 = vector.shape_cast %1 : vector<1x128x128xf32> to vector<128x128xf32>
    %c0_4 = arith.constant 0 : index
    %c0_5 = arith.constant 0 : index
    %c0_6 = arith.constant 0 : index
    %3 = vector.load %arg2[%c0_4, %c0_5, %c0_6] : memref<3x4x128xf32, #tpu.memory_space<vmem>>, vector<1x4x128xf32>
    %4 = vector.shape_cast %3 : vector<1x4x128xf32> to vector<4x128xf32>
    %cst = arith.constant dense<0.000000e+00> : vector<128x4xf32>
    %5 = tpu.matmul %2, %4, %cst {dimension_numbers = #tpu.dot_dimension_numbers<[1], [1], [0], [0], [0, 0, 1, 0], [], []>} : vector<128x128xf32>, vector<4x128xf32>, vector<128x4xf32> -> vector<128x4xf32>
    %c0_7 = arith.constant 0 : index
    %6 = memref.load %arg4[%c0_7] : memref<3xf32, #tpu.memory_space<smem>>
    %7 = vector.broadcast %6 : f32 to vector<128x4xf32>
    %8 = arith.addf %5, %7 : vector<128x4xf32>
    %9 = math.tanh %8 : vector<128x4xf32>
    %10 = math.exp %9 : vector<128x4xf32>
    %c1 = arith.constant 1 : index
    %c0_8 = arith.constant 0 : index
    %c0_9 = arith.constant 0 : index
    %11 = vector.load %arg1[%c1, %c0_8, %c0_9] : memref<3x128x128xf32, #tpu.memory_space<vmem>>, vector<1x128x128xf32>
    %12 = vector.shape_cast %11 : vector<1x128x128xf32> to vector<128x128xf32>
    %c1_10 = arith.constant 1 : index
    %c0_11 = arith.constant 0 : index
    %c0_12 = arith.constant 0 : index
    %13 = vector.load %arg2[%c1_10, %c0_11, %c0_12] : memref<3x4x128xf32, #tpu.memory_space<vmem>>, vector<1x4x128xf32>
    %14 = vector.shape_cast %13 : vector<1x4x128xf32> to vector<4x128xf32>
    %cst_13 = arith.constant dense<0.000000e+00> : vector<128x4xf32>
    %15 = tpu.matmul %12, %14, %cst_13 {dimension_numbers = #tpu.dot_dimension_numbers<[1], [1], [0], [0], [0, 0, 1, 0], [], []>} : vector<128x128xf32>, vector<4x128xf32>, vector<128x4xf32> -> vector<128x4xf32>
    %c1_14 = arith.constant 1 : index
    %16 = memref.load %arg4[%c1_14] : memref<3xf32, #tpu.memory_space<smem>>
    %17 = vector.broadcast %16 : f32 to vector<128x4xf32>
    %18 = arith.addf %15, %17 : vector<128x4xf32>
    %19 = math.tanh %18 : vector<128x4xf32>
    %20 = math.exp %19 : vector<128x4xf32>
    %21 = arith.addf %10, %20 : vector<128x4xf32>
    %c2 = arith.constant 2 : index
    %c0_15 = arith.constant 0 : index
    %c0_16 = arith.constant 0 : index
    %22 = vector.load %arg1[%c2, %c0_15, %c0_16] : memref<3x128x128xf32, #tpu.memory_space<vmem>>, vector<1x128x128xf32>
    %23 = vector.shape_cast %22 : vector<1x128x128xf32> to vector<128x128xf32>
    %c2_17 = arith.constant 2 : index
    %c0_18 = arith.constant 0 : index
    %c0_19 = arith.constant 0 : index
    %24 = vector.load %arg2[%c2_17, %c0_18, %c0_19] : memref<3x4x128xf32, #tpu.memory_space<vmem>>, vector<1x4x128xf32>
    %25 = vector.shape_cast %24 : vector<1x4x128xf32> to vector<4x128xf32>
    %cst_20 = arith.constant dense<0.000000e+00> : vector<128x4xf32>
    %26 = tpu.matmul %23, %25, %cst_20 {dimension_numbers = #tpu.dot_dimension_numbers<[1], [1], [0], [0], [0, 0, 1, 0], [], []>} : vector<128x128xf32>, vector<4x128xf32>, vector<128x4xf32> -> vector<128x4xf32>
    %c2_21 = arith.constant 2 : index
    %27 = memref.load %arg4[%c2_21] : memref<3xf32, #tpu.memory_space<smem>>
    %28 = vector.broadcast %27 : f32 to vector<128x4xf32>
    %29 = arith.addf %26, %28 : vector<128x4xf32>
    %30 = math.tanh %29 : vector<128x4xf32>
    %31 = math.exp %30 : vector<128x4xf32>
    %32 = arith.addf %21, %31 : vector<128x4xf32>
    %33 = tpu.reciprocal %32 : vector<128x4xf32> -> vector<128x4xf32>
    %34 = arith.mulf %10, %33 : vector<128x4xf32>
    %cst_22 = arith.constant dense<0.000000e+00> : vector<128x128xf32>
    %35 = tpu.matmul %34, %0, %cst_22 {dimension_numbers = #tpu.dot_dimension_numbers<[1], [0], [0], [1], [0, 0, 1, 1], [], []>} : vector<128x4xf32>, vector<4x128xf32>, vector<128x128xf32> -> vector<128x128xf32>
    %36 = arith.mulf %35, %2 : vector<128x128xf32>
    %37 = arith.mulf %20, %33 : vector<128x4xf32>
    %cst_23 = arith.constant dense<0.000000e+00> : vector<128x128xf32>
    %38 = tpu.matmul %37, %0, %cst_23 {dimension_numbers = #tpu.dot_dimension_numbers<[1], [0], [0], [1], [0, 0, 1, 1], [], []>} : vector<128x4xf32>, vector<4x128xf32>, vector<128x128xf32> -> vector<128x128xf32>
    %39 = arith.mulf %38, %12 : vector<128x128xf32>
    %40 = arith.addf %36, %39 : vector<128x128xf32>
    %41 = arith.mulf %31, %33 : vector<128x4xf32>
    %cst_24 = arith.constant dense<0.000000e+00> : vector<128x128xf32>
    %42 = tpu.matmul %41, %0, %cst_24 {dimension_numbers = #tpu.dot_dimension_numbers<[1], [0], [0], [1], [0, 0, 1, 1], [], []>} : vector<128x4xf32>, vector<4x128xf32>, vector<128x128xf32> -> vector<128x128xf32>
    %43 = arith.mulf %42, %23 : vector<128x128xf32>
    %44 = arith.addf %40, %43 : vector<128x128xf32>
    %c0_25 = arith.constant 0 : index
    %c0_26 = arith.constant 0 : index
    %45 = vector.load %arg5[%c0_25, %c0_26] : memref<128x128xf32, #tpu.memory_space<vmem>>, vector<128x128xf32>
    tpu.vector_store %arg5[%c0_25, %c0_26], %44 {strides = array<i32>} : memref<128x128xf32, #tpu.memory_space<vmem>>, vector<128x128xf32>,
    return
  }
  func.func @transform_0(%arg0: i32) -> (i32, i32, i32) {
    %c0_i32 = arith.constant 0 : i32
    %c0_i32_0 = arith.constant 0 : i32
    %c0_i32_1 = arith.constant 0 : i32
    return %c0_i32, %arg0, %c0_i32_0 : i32, i32, i32
  }
  func.func @transform_1(%arg0: i32) -> (i32, i32, i32) {
    %c0_i32 = arith.constant 0 : i32
    %c0_i32_0 = arith.constant 0 : i32
    %c0_i32_1 = arith.constant 0 : i32
    %c0_i32_2 = arith.constant 0 : i32
    return %c0_i32, %c0_i32_0, %c0_i32_1 : i32, i32, i32
  }
  func.func @transform_2(%arg0: i32) -> (i32, i32) {
    %c0_i32 = arith.constant 0 : i32
    %c0_i32_0 = arith.constant 0 : i32
    %c0_i32_1 = arith.constant 0 : i32
    return %c0_i32, %c0_i32_0 : i32, i32
  }
  func.func @transform_3(%arg0: i32) -> i32 {
    %c0_i32 = arith.constant 0 : i32
    %c0_i32_0 = arith.constant 0 : i32
    return %c0_i32 : i32
  }
  func.func @transform_4(%arg0: i32) -> (i32, i32) {
    %c0_i32 = arith.constant 0 : i32
    %c0_i32_0 = arith.constant 0 : i32
    return %arg0, %c0_i32 : i32, i32
  }
}

</mosaic_0001>

<llo_original>
// kernel: tpu_custom_call.1
$region0: #{tpu_custom_call.1}
  #allocation0 [shape = 'u32[]', space=smem, size = 0x4, offset = 0x4, fixed_abs, tag = 'smem constant byte address 0x4 - core index']
  #allocation1 [shape = 'u32[144,128]{1,0:T(1,128)}', space=vmem, size = 0x12000, scoped, tag = 'internal scratch']
  #allocation10 [shape = 's32[]', space=sflag, size = 0x4, offset = 0, fixed_abs, tag = 'sflag constant byte address 0x0 - dummy sync flag']
  %s0 = inlined_call_operand.hbm [shape: f32[3,256,128], index: 0, kind: input, shape index: {}]
  %s1 = inlined_call_operand.hbm [shape: f32[3,4,128], index: 1, kind: input, shape index: {}]
  %s2 = inlined_call_operand.vmem [shape: f32[4,128], index: 2, kind: input, shape index: {}]
  %s3 = inlined_call_operand.vmem [shape: f32[3], index: 3, kind: input, shape index: {}]
  %s4 = inlined_call_operand.hbm [shape: f32[256,128], index: 4, kind: output, shape index: {}]
  %s5 = sld [smem:[#allocation0]]
  $region61: #{tpu_custom_call.1} parent=0
    _
  %s7 = ssub.s32 1, %s5
  %s8 = scalar_select 0, %s7, %s5
  $region1: #{tpu_custom_call.1} parent=0
    #allocation2 [shape = 'u8[393216]{0}', space=vmem, size = 0x60000, scoped, tag = 'input window, operand 0']
    #allocation3 [shape = 's32[2]{0}', space=sflag, size = 0x8, scoped, tag = 'scoped memory for tpu_custom_call.1']
    #allocation4 [shape = 's32[2]{0}', space=sflag, size = 0x8, scoped, tag = 'scoped memory for tpu_custom_call.1']
    #allocation5 [shape = 's32[2]{0}', space=sflag, size = 0x8, scoped, tag = 'scoped memory for tpu_custom_call.1']
    #allocation6 [shape = 'u8[6144]{0}', space=vmem, size = 0x1800, scoped, tag = 'input window, operand 1, single buffered']
    #allocation7 [shape = 's32[1]{0}', space=sflag, size = 0x4, scoped, tag = 'scoped memory for tpu_custom_call.1']
    #allocation8 [shape = 'u8[512]{0}', space=smem, size = 0x200, scoped, tag = 'input window, operand 3, single buffered']
    #allocation9 [shape = 'u8[131072]{0}', space=vmem, size = 0x20000, scoped, tag = 'output window, operand 0']
    %9 = vsyncpa [#allocation3], 0
    %s10 = scalar_lea.sflag [#allocation3], 1
    %11 = vsyncpa %s10, 0
    %12 = vsyncpa [#allocation7], 0
    %13 = vsyncpa [#allocation5], 0
    %14 = vsyncpa [#allocation4], 0
    %s15 = scalar_lea.sflag [#allocation4], 1
    %16 = vsyncpa %s15, 0
    loop: start=0, step=1, limit=4
    $region2: #{tpu_custom_call.1} parent=1 // loop_pre_header
      _
    $region3: #{tpu_custom_call.1} parent=1 // loop_header
      %s18 = sphi 0, %s22
      %p19 = scmp.ge.s32.totalorder %s18, 4
      %s28 = sphi 0, %s30
      %s31 = sphi 0, %s28
      %s32 = sphi 0, %s31
      %s48 = sphi 0, %s32
      %s52 = sphi 0, %s52
      %s54 = sphi 0, %s52
      %s55 = sphi 0, %s54
      %s69 = sphi 0, %s55
      %s73 = sphi 0, %s73
      %s75 = sphi 0, %s73
      %s76 = sphi 0, %s75
      %s90 = sphi 0, %s76
      %s94 = sphi 0, %s94
      %s96 = sphi 0, %s94
      %s97 = sphi 0, %s96
      %s111 = sphi 0, %s97
      %s117 = sphi 0, %s119
      %s120 = sphi 0, %s117
      %s121 = sphi 0, %s120
      %s137 = sphi 0, %s121
    $region4: #{tpu_custom_call.1} parent=1 // loop_header_branch
      %21 = sbr.rel (%p19) target = $region8
    $region5: #{tpu_custom_call.1} parent=1 // loop_body
      %s23 = ssub.s32 %s18, 1
      %s24 = ssub.s32 %s18, 2
      %s25 = sadd.s32 %s18, 1
      %s26 = ssub.s32 %s18, %s25
      %p27 = scmp.eq.s32.totalorder %s26, 0
      %s29 = sadd.s32 %s28, 1
      %s30 = scalar_select %p27, %s28, %s29
      %p33 = pneg %p27
      %p34 = scmp.eq.s32.totalorder %s18, 1
      %p35 = por %p33, %p34
      %p36 = scmp.ne.s32.totalorder %s28, %s31
      %p37 = scmp.eq.s32.totalorder %s18, 0
      %p38 = por %p36, %p37
      %p39 = scmp.ne.s32.totalorder %s28, %s31
      %p40 = scmp.eq.s32.totalorder %s23, 1
      %p41 = por %p39, %p40
      %p42 = scmp.ne.s32.totalorder %s31, %s32
      %p43 = scmp.eq.s32.totalorder %s23, 0
      %p44 = por %p42, %p43
      %p45 = scmp.ne.s32.totalorder %s31, %s32
      %p46 = scmp.eq.s32.totalorder %s24, 1
      %p47 = por %p45, %p46
      %p49 = scmp.ne.s32.totalorder %s32, %s48
      %p50 = scmp.eq.s32.totalorder %s24, 0
      %p51 = por %p49, %p50
      %s53 = sadd.s32 %s52, 1
      %p56 = scmp.eq.s32.totalorder %s18, 1
      %p57 = scmp.ne.s32.totalorder %s52, %s54
      %p58 = scmp.eq.s32.totalorder %s18, 0
      %p59 = por %p57, %p58
      %p60 = scmp.ne.s32.totalorder %s52, %s54
      %p61 = scmp.eq.s32.totalorder %s23, 1
      %p62 = por %p60, %p61
      %p63 = scmp.ne.s32.totalorder %s54, %s55
      %p64 = scmp.eq.s32.totalorder %s23, 0
      %p65 = por %p63, %p64
      %p66 = scmp.ne.s32.totalorder %s54, %s55
      %p67 = scmp.eq.s32.totalorder %s24, 1
      %p68 = por %p66, %p67
      %p70 = scmp.ne.s32.totalorder %s55, %s69
      %p71 = scmp.eq.s32.totalorder %s24, 0
      %p72 = por %p70, %p71
      %s74 = sadd.s32 %s73, 1
      %p77 = scmp.eq.s32.totalorder %s18, 1
      %p78 = scmp.ne.s32.totalorder %s73, %s75
      %p79 = scmp.eq.s32.totalorder %s18, 0
      %p80 = por %p78, %p79
      %p81 = scmp.ne.s32.totalorder %s73, %s75
      %p82 = scmp.eq.s32.totalorder %s23, 1
      %p83 = por %p81, %p82
      %p84 = scmp.ne.s32.totalorder %s75, %s76
      %p85 = scmp.eq.s32.totalorder %s23, 0
      %p86 = por %p84, %p85
      %p87 = scmp.ne.s32.totalorder %s75, %s76
      %p88 = scmp.eq.s32.totalorder %s24, 1
      %p89 = por %p87, %p88
      %p91 = scmp.ne.s32.totalorder %s76, %s90
      %p92 = scmp.eq.s32.totalorder %s24, 0
      %p93 = por %p91, %p92
      %s95 = sadd.s32 %s94, 1
      %p98 = scmp.eq.s32.totalorder %s18, 1
      %p99 = scmp.ne.s32.totalorder %s94, %s96
      %p100 = scmp.eq.s32.totalorder %s18, 0
      %p101 = por %p99, %p100
      %p102 = scmp.ne.s32.totalorder %s94, %s96
      %p103 = scmp.eq.s32.totalorder %s23, 1
      %p104 = por %p102, %p103
      %p105 = scmp.ne.s32.totalorder %s96, %s97
      %p106 = scmp.eq.s32.totalorder %s23, 0
      %p107 = por %p105, %p106
      %p108 = scmp.ne.s32.totalorder %s96, %s97
      %p109 = scmp.eq.s32.totalorder %s24, 1
      %p110 = por %p108, %p109
      %p112 = scmp.ne.s32.totalorder %s97, %s111
      %p113 = scmp.eq.s32.totalorder %s24, 0
      %p114 = por %p112, %p113
      %s115 = ssub.s32 %s18, %s25
      %p116 = scmp.eq.s32.totalorder %s115, 0
      %s118 = sadd.s32 %s117, 1
      %s119 = scalar_select %p116, %s117, %s118
      %p122 = pneg %p116
      %p123 = scmp.eq.s32.totalorder %s18, 1
      %p124 = por %p122, %p123
      %p125 = scmp.ne.s32.totalorder %s117, %s120
      %p126 = scmp.eq.s32.totalorder %s18, 0
      %p127 = por %p125, %p126
      %p128 = scmp.ne.s32.totalorder %s117, %s120
      %p129 = scmp.eq.s32.totalorder %s23, 1
      %p130 = por %p128, %p129
      %p131 = scmp.ne.s32.totalorder %s120, %s121
      %p132 = scmp.eq.s32.totalorder %s23, 0
      %p133 = por %p131, %p132
      %p134 = scmp.ne.s32.totalorder %s120, %s121
      %p135 = scmp.eq.s32.totalorder %s24, 1
      %p136 = por %p134, %p135
      %p138 = scmp.ne.s32.totalorder %s121, %s137
      %p139 = scmp.eq.s32.totalorder %s24, 0
      %p140 = por %p138, %p139
      %p141 = scmp.le.s32.totalorder 1, %s18
      %p142 = scmp.lt.s32.totalorder %s18, 3
      %p143 = pnand %p141, %p142
      %p144 = pneg %p143
      // Predicated region
      $region9: #{tpu_custom_call.1} parent=5 // pred_check
        _
      $region10: #{tpu_custom_call.1} parent=5 // pred_check_branch
        %146 = sbr.rel (%p143) target = $region12
      $region11: #{tpu_custom_call.1} parent=5 // pred_region
        %s147 = ssub.s32 %s18, 1
        // Predicated region
        $region13: #{tpu_custom_call.1} parent=11 // pred_check
          %p148 = pneg %p65
        $region14: #{tpu_custom_call.1} parent=11 // pred_check_branch
          %150 = sbr.rel (%p148) target = $region16
        $region15: #{tpu_custom_call.1} parent=11 // pred_region
          %s152 = ssub.s32 192, 192
          %153 = vsyncadd [#allocation7], %s152
          %s154 = sshll.u32 [#allocation6], 4
          %s155 = int_to_ptr.vmem [resolvable:$true] %s154
          %160 = dma.hbm_to_vmem [thread:$0]  %s1, 192, %s155, [#allocation7], 64, 64, 4
        $region16: #{tpu_custom_call.1} parent=11 // pred_fallthru
          _
        // Predicated region
        $region17: #{tpu_custom_call.1} parent=11 // pred_check
          %p161 = pneg %p86
        $region18: #{tpu_custom_call.1} parent=11 // pred_check_branch
          %163 = sbr.rel (%p161) target = $region20
        $region19: #{tpu_custom_call.1} parent=11 // pred_region
          _
        $region20: #{tpu_custom_call.1} parent=11 // pred_fallthru
          _
        // Predicated region
        $region21: #{tpu_custom_call.1} parent=11 // pred_check
          %p164 = pneg %p107
        $region22: #{tpu_custom_call.1} parent=11 // pred_check_branch
          %166 = sbr.rel (%p164) target = $region24
        $region23: #{tpu_custom_call.1} parent=11 // pred_region
          %s168 = ssub.s32 16, 16
          %169 = vsyncadd [#allocation5], %s168
          %s171 = sshll.u32 %s3, 4
          %s172 = int_to_ptr.vmem [resolvable:$true] %s171
          %174 = dma.vmem_to_smem %s172, 16, [#allocation8], [#allocation5]
        $region24: #{tpu_custom_call.1} parent=11 // pred_fallthru
          _
      $region12: #{tpu_custom_call.1} parent=5 // pred_fallthru
        _
      %p175 = scmp.lt.s32.totalorder %s18, 2
      // Predicated region
      $region25: #{tpu_custom_call.1} parent=5 // pred_check
        %p176 = pneg %p175
      $region26: #{tpu_custom_call.1} parent=5 // pred_check_branch
        %178 = sbr.rel (%p176) target = $region28
      $region27: #{tpu_custom_call.1} parent=5 // pred_region
        // Predicated region
        $region29: #{tpu_custom_call.1} parent=27 // pred_check
          %p179 = pneg %p38
        $region30: #{tpu_custom_call.1} parent=27 // pred_check_branch
          %181 = sbr.rel (%p179) target = $region32
        $region31: #{tpu_custom_call.1} parent=27 // pred_region
          #allocation11 [shape = 'u32[6]{0}', space=smem, size = 0x18, scoped, tag = 'DMA stride descriptor']
          %s182 = sand.u32 %s28, 1
          %s183 = scalar_lea.sflag [#allocation3], %s182
          %s184 = sand.u32 %s28, 1
          %s185 = smul.addr %s184, 384
          %s186 = scalar_lea.vmem [#allocation2], %s185
          %s187 = smul.u32 16, %s18
          %s189 = ssub.s32 6144, 6144
          %190 = vsyncadd %s183, %s189
          %s191 = smul.addr %s187, 128
          %s192 = scalar_lea.hbm %s0, %s191
          %s194 = sshll.u32 1, 14
          %s195 = sxor.u32 4294967295, %s194
          %s197 = sld [smem:[#allocation0]]
          %s198 = sadd.s32 2, %s197
          %s200 = sshll.u32 7, 26
          %s201 = sxor.u32 4294967295, %s200
          %s202 = sand.u32 0, %s201
          %s203 = sshll.u32 %s198, 26
          %s204 = sor.u32 %s202, %s203
          %s205 = sshll.u32 %s186, 4
          %s206 = int_to_ptr.vmem [resolvable:$true] %s205
          %212 = sst [smem:[#allocation11]] 4096
          %s213 = scalar_lea.smem [#allocation11], 1
          %214 = sst [smem:[%s213]] 2048
          %s215 = scalar_lea.smem [#allocation11], 2
          %216 = sst [smem:[%s215]] 16
          %s217 = scalar_lea.smem [#allocation11], 3
          %218 = sst [smem:[%s217]] 128
          %s219 = scalar_lea.smem [#allocation11], 4
          %220 = sst [smem:[%s219]] 128
          %s221 = scalar_lea.smem [#allocation11], 5
          %222 = sst [smem:[%s221]] 8
          %224 = dma.general %s192, 6144, %s206, %s183, [#allocation10], [#allocation11], %s204, 0
        $region32: #{tpu_custom_call.1} parent=27 // pred_fallthru
          _
      $region28: #{tpu_custom_call.1} parent=5 // pred_fallthru
        _
      %p225 = scmp.le.s32.totalorder 1, %s18
      %p226 = scmp.lt.s32.totalorder %s18, 3
      %p227 = pnand %p225, %p226
      %p228 = pneg %p227
      // Predicated region
      $region33: #{tpu_custom_call.1} parent=5 // pred_check
        _
      $region34: #{tpu_custom_call.1} parent=5 // pred_check_branch
        %230 = sbr.rel (%p227) target = $region36
      $region35: #{tpu_custom_call.1} parent=5 // pred_region
        %s231 = ssub.s32 %s18, 1
        %s232 = sand.u32 %s31, 1
        %s233 = scalar_lea.sflag [#allocation3], %s232
        %s234 = sand.u32 %s31, 1
        %s235 = smul.addr %s234, 384
        %s236 = scalar_lea.vmem [#allocation2], %s235
        // Predicated region
        $region37: #{tpu_custom_call.1} parent=35 // pred_check
          %p237 = pneg %p44
        $region38: #{tpu_custom_call.1} parent=35 // pred_check_branch
          %239 = sbr.rel (%p237) target = $region40
        $region39: #{tpu_custom_call.1} parent=35 // pred_region
          %240 = dma.done %s233, 6144
        $region40: #{tpu_custom_call.1} parent=35 // pred_fallthru
          _
        // Predicated region
        $region41: #{tpu_custom_call.1} parent=35 // pred_check
          %p241 = pneg %p65
        $region42: #{tpu_custom_call.1} parent=35 // pred_check_branch
          %243 = sbr.rel (%p241) target = $region44
        $region43: #{tpu_custom_call.1} parent=35 // pred_region
          %244 = dma.done [#allocation7], 192
        $region44: #{tpu_custom_call.1} parent=35 // pred_fallthru
          _
        // Predicated region
        $region45: #{tpu_custom_call.1} parent=35 // pred_check
          %p245 = pneg %p107
        $region46: #{tpu_custom_call.1} parent=35 // pred_check_branch
          %247 = sbr.rel (%p245) target = $region48
        $region47: #{tpu_custom_call.1} parent=35 // pred_region
          %248 = dma.done [#allocation5], 16
        $region48: #{tpu_custom_call.1} parent=35 // pred_fallthru
          _
        %249 = sfence
        %s250 = sand.u32 %s31, 1
        %s251 = scalar_lea.sflag [#allocation3], %s250
        %s252 = sand.u32 %s31, 1
        %s253 = smul.addr %s252, 384
        %s254 = scalar_lea.vmem [#allocation2], %s253
        %p255 = pneg %p44
        %p256 = pneg %p41
        %p257 = pneg %p65
        %p258 = pneg %p62
        %p259 = pneg %p86
        %p260 = pneg %p83
        %p261 = pneg %p107
        %p262 = pneg %p104
        %p263 = pneg %p133
        %p264 = pneg %p130
        %s265 = sand.u32 %s120, 1
        %s266 = scalar_lea.sflag [#allocation4], %s265
        %s267 = sand.u32 %s120, 1
        %s268 = smul.addr %s267, 128
        %s269 = scalar_lea.vmem [#allocation9], %s268
        %s270 = smul.u32 16, %s23
        %s271 = smul.u32 16, %s23
        %v272 = vld [vmem:[%s2] sm:$0xf]
        %v273 = vld [vmem:[%s236] sm:$0xff]
        %v274 = vld [vmem:[%s236 + $0x8] sm:$0xff]
        %v275 = vld [vmem:[%s236 + $0x10] sm:$0xff]
        %v276 = vld [vmem:[%s236 + $0x18] sm:$0xff]
        %v277 = vld [vmem:[%s236 + $0x20] sm:$0xff]
        %v278 = vld [vmem:[%s236 + $0x28] sm:$0xff]
        %v279 = vld [vmem:[%s236 + $0x30] sm:$0xff]
        %v280 = vld [vmem:[%s236 + $0x38] sm:$0xff]
        %v281 = vld [vmem:[%s236 + $0x40] sm:$0xff]
        %v282 = vld [vmem:[%s236 + $0x48] sm:$0xff]
        %v283 = vld [vmem:[%s236 + $0x50] sm:$0xff]
        %v284 = vld [vmem:[%s236 + $0x58] sm:$0xff]
        %v285 = vld [vmem:[%s236 + $0x60] sm:$0xff]
        %v286 = vld [vmem:[%s236 + $0x68] sm:$0xff]
        %v287 = vld [vmem:[%s236 + $0x70] sm:$0xff]
        %v288 = vld [vmem:[%s236 + $0x78] sm:$0xff]
        %v289 = vld [vmem:[#allocation6] sm:$0xf]
        %s290 = sld [smem:[#allocation8]]
        %v291 = vstv %s290
        %292 = vmatprep.subr.mxu0 0.0
        %293 = vmatpush1.xpose.msra.mxu0 %v289
        %294 = vmatprep.subr.mxu0 0.0
        %295 = vmatpush1.xpose.msra.mxu0 0.0
        %296 = vmatprep.subr.mxu0 0.0
        %297 = vmatpush1.xpose.msra.mxu0 0.0
        %298 = vmatprep.subr.mxu0 0.0
        %299 = vmatpush1.xpose.msra.mxu0 0.0
        %300 = vmatprep.subr.mxu0 0.0
        %301 = vmatpush1.xpose.msra.mxu0 0.0
        %302 = vmatprep.subr.mxu0 0.0
        %303 = vmatpush1.xpose.msra.mxu0 0.0
        %304 = vmatprep.subr.mxu0 0.0
        %305 = vmatpush1.xpose.msra.mxu0 0.0
        %306 = vmatprep.subr.mxu0 0.0
        %307 = vmatpush1.xpose.msra.mxu0 0.0
        %308 = vmatprep.subr.mxu0 0.0
        %309 = vmatpush1.xpose.msra.mxu0 0.0
        %310 = vmatprep.subr.mxu0 0.0
        %311 = vmatpush1.xpose.msra.mxu0 0.0
        %312 = vmatprep.subr.mxu0 0.0
        %313 = vmatpush1.xpose.msra.mxu0 0.0
        %314 = vmatprep.subr.mxu0 0.0
        %315 = vmatpush1.xpose.msra.mxu0 0.0
        %316 = vmatprep.subr.mxu0 0.0
        %317 = vmatpush1.xpose.msra.mxu0 0.0
        %318 = vmatprep.subr.mxu0 0.0
        %319 = vmatpush1.xpose.msra.mxu0 0.0
        %320 = vmatprep.subr.mxu0 0.0
        %321 = vmatpush1.xpose.msra.mxu0 0.0
        %322 = vmatprep.subr.mxu0 0.0
        %323 = vmatpush1.xpose.msra.mxu0 0.0
        %324 = vmatprep.subr.mxu0 0.0
        %325 = vmatpush1.xpose.msra.mxu0 0.0
        %326 = vmatprep.subr.mxu0 0.0
        %327 = vmatpush1.xpose.msra.mxu0 0.0
        %328 = vmatprep.subr.mxu0 0.0
        %329 = vmatpush1.xpose.msra.mxu0 0.0
        %330 = vmatprep.subr.mxu0 0.0
        %331 = vmatpush1.xpose.msra.mxu0 0.0
        %332 = vmatprep.subr.mxu0 0.0
        %333 = vmatpush1.xpose.msra.mxu0 0.0
        %334 = vmatprep.subr.mxu0 0.0
        %335 = vmatpush1.xpose.msra.mxu0 0.0
        %336 = vmatprep.subr.mxu0 0.0
        %337 = vmatpush1.xpose.msra.mxu0 0.0
        %338 = vmatprep.subr.mxu0 0.0
        %339 = vmatpush1.xpose.msra.mxu0 0.0
        %340 = vmatprep.subr.mxu0 0.0
        %341 = vmatpush1.xpose.msra.mxu0 0.0
        %342 = vmatprep.subr.mxu0 0.0
        %343 = vmatpush1.xpose.msra.mxu0 0.0
        %344 = vmatprep.subr.mxu0 0.0
        %345 = vmatpush1.xpose.msra.mxu0 0.0
        %346 = vmatprep.subr.mxu0 0.0
        %347 = vmatpush1.xpose.msra.mxu0 0.0
        %348 = vmatprep.subr.mxu0 0.0
        %349 = vmatpush1.xpose.msra.mxu0 0.0
        %350 = vmatprep.subr.mxu0 0.0
        %351 = vmatpush1.xpose.msra.mxu0 0.0
        %352 = vmatprep.subr.mxu0 0.0
        %353 = vmatpush1.xpose.msra.mxu0 0.0
        %354 = vmatprep.subr.mxu0 0.0
        %355 = vmatpush1.xpose.msra.mxu0 0.0
        %356 = vmatprep.mubr.f32.mxu0 0.0
        %357 = vmatmul.mubr.f32.gmra.mrb[0].mxu0 %v273
        %v358 = vpop.f32.mrb[0].mxu0
        %v359 = vadd.f32 %v291, %v358
        %v360 = vpop.f32.mrb[0].mxu0
        %361 = vmatprep.mubr.f32.mxu0 0.0
        %362 = vmatmul.mubr.f32.gmra.mrb[0].mxu0 %v274
        %v363 = vpop.f32.mrb[0].mxu0
        %v364 = vadd.f32 %v291, %v363
        %v365 = vpop.f32.mrb[0].mxu0
        %366 = vmatprep.mubr.f32.mxu0 0.0
        %367 = vmatmul.mubr.f32.gmra.mrb[0].mxu0 %v275
        %v368 = vpop.f32.mrb[0].mxu0
        %v369 = vadd.f32 %v291, %v368
        %v370 = vpop.f32.mrb[0].mxu0
        %371 = vmatprep.mubr.f32.mxu0 0.0
        %372 = vmatmul.mubr.f32.gmra.mrb[0].mxu0 %v276
        %v373 = vpop.f32.mrb[0].mxu0
        %v374 = vadd.f32 %v291, %v373
        %v375 = vpop.f32.mrb[0].mxu0
        %376 = vmatprep.mubr.f32.mxu0 0.0
        %377 = vmatmul.mubr.f32.gmra.mrb[0].mxu0 %v277
        %v378 = vpop.f32.mrb[0].mxu0
        %v379 = vadd.f32 %v291, %v378
        %v380 = vpop.f32.mrb[0].mxu0
        %381 = vmatprep.mubr.f32.mxu0 0.0
        %382 = vmatmul.mubr.f32.gmra.mrb[0].mxu0 %v278
        %v383 = vpop.f32.mrb[0].mxu0
        %v384 = vadd.f32 %v291, %v383
        %v385 = vpop.f32.mrb[0].mxu0
        %386 = vmatprep.mubr.f32.mxu0 0.0
        %387 = vmatmul.mubr.f32.gmra.mrb[0].mxu0 %v279
        %v388 = vpop.f32.mrb[0].mxu0
        %v389 = vadd.f32 %v291, %v388
        %v390 = vpop.f32.mrb[0].mxu0
        %391 = vmatprep.mubr.f32.mxu0 0.0
        %392 = vmatmul.mubr.f32.gmra.mrb[0].mxu0 %v280
        %v393 = vpop.f32.mrb[0].mxu0
        %v394 = vadd.f32 %v291, %v393
        %v395 = vpop.f32.mrb[0].mxu0
        %396 = vmatprep.mubr.f32.mxu0 0.0
        %397 = vmatmul.mubr.f32.gmra.mrb[0].mxu0 %v281
        %v398 = vpop.f32.mrb[0].mxu0
        %v399 = vadd.f32 %v291, %v398
        %v400 = vpop.f32.mrb[0].mxu0
        %401 = vmatprep.mubr.f32.mxu0 0.0
        %402 = vmatmul.mubr.f32.gmra.mrb[0].mxu0 %v282
        %v403 = vpop.f32.mrb[0].mxu0
        %v404 = vadd.f32 %v291, %v403
        %v405 = vpop.f32.mrb[0].mxu0
        %406 = vmatprep.mubr.f32.mxu0 0.0
        %407 = vmatmul.mubr.f32.gmra.mrb[0].mxu0 %v283
        %v408 = vpop.f32.mrb[0].mxu0
        %v409 = vadd.f32 %v291, %v408
        %v410 = vpop.f32.mrb[0].mxu0
        %411 = vmatprep.mubr.f32.mxu0 0.0
        %412 = vmatmul.mubr.f32.gmra.mrb[0].mxu0 %v284
        %v413 = vpop.f32.mrb[0].mxu0
        %v414 = vadd.f32 %v291, %v413
        %v415 = vpop.f32.mrb[0].mxu0
        %416 = vmatprep.mubr.f32.mxu0 0.0
        %417 = vmatmul.mubr.f32.gmra.mrb[0].mxu0 %v285
        %v418 = vpop.f32.mrb[0].mxu0
        %v419 = vadd.f32 %v291, %v418
        %v420 = vpop.f32.mrb[0].mxu0
        %421 = vmatprep.mubr.f32.mxu0 0.0
        %422 = vmatmul.mubr.f32.gmra.mrb[0].mxu0 %v286
        %v423 = vpop.f32.mrb[0].mxu0
        %v424 = vadd.f32 %v291, %v423
        %v425 = vpop.f32.mrb[0].mxu0
        %426 = vmatprep.mubr.f32.mxu0 0.0
        %427 = vmatmul.mubr.f32.gmra.mrb[0].mxu0 %v287
        %v428 = vpop.f32.mrb[0].mxu0
        %v429 = vadd.f32 %v291, %v428
        %v430 = vpop.f32.mrb[0].mxu0
        %431 = vmatprep.mubr.f32.mxu0 0.0
        %432 = vmatmul.mubr.f32.gmra.mrb[0].mxu0 %v288
        %v433 = vpop.f32.mrb[0].mxu0
        %v434 = vadd.f32 %v291, %v433
        %v435 = vpop.f32.mrb[0].mxu0
        %436 = vdwg.mxu0
        %v437 = vtanh.pop %v359
        %v438 = vtanh.pop %v364
        %v439 = vtanh.pop %v369
        %v440 = vtanh.pop %v374
        %v441 = vtanh.pop %v379
        %v442 = vtanh.pop %v384
        %v443 = vtanh.pop %v389
        %v444 = vtanh.pop %v394
        %v445 = vtanh.pop %v399
        %v446 = vtanh.pop %v404
        %v447 = vtanh.pop %v409
        %v448 = vtanh.pop %v414
        %v449 = vtanh.pop %v419
        %v450 = vtanh.pop %v424
        %v451 = vtanh.pop %v429
        %v452 = vtanh.pop %v434
        %v453 = vmul.f32 %v437, 1.442695
        %v454 = vpow.pop %v453
        %v455 = vmul.f32 %v438, 1.442695
        %v456 = vpow.pop %v455
        %v457 = vmul.f32 %v439, 1.442695
        %v458 = vpow.pop %v457
        %v459 = vmul.f32 %v440, 1.442695
        %v460 = vpow.pop %v459
        %v461 = vmul.f32 %v441, 1.442695
        %v462 = vpow.pop %v461
        %v463 = vmul.f32 %v442, 1.442695
        %v464 = vpow.pop %v463
        %v465 = vmul.f32 %v443, 1.442695
        %v466 = vpow.pop %v465
        %v467 = vmul.f32 %v444, 1.442695
        %v468 = vpow.pop %v467
        %v469 = vmul.f32 %v445, 1.442695
        %v470 = vpow.pop %v469
        %v471 = vmul.f32 %v446, 1.442695
        %v472 = vpow.pop %v471
        %v473 = vmul.f32 %v447, 1.442695
        %v474 = vpow.pop %v473
        %v475 = vmul.f32 %v448, 1.442695
        %v476 = vpow.pop %v475
        %v477 = vmul.f32 %v449, 1.442695
        %v478 = vpow.pop %v477
        %v479 = vmul.f32 %v450, 1.442695
        %v480 = vpow.pop %v479
        %v481 = vmul.f32 %v451, 1.442695
        %v482 = vpow.pop %v481
        %v483 = vmul.f32 %v452, 1.442695
        %v484 = vpow.pop %v483
        %s485 = scalar_lea.vmem %s236, 128 [#allocation2]
        %v486 = vld [vmem:[%s485] sm:$0xff]
        %v487 = vld [vmem:[%s485 + $0x8] sm:$0xff]
        %v488 = vld [vmem:[%s485 + $0x10] sm:$0xff]
        %v489 = vld [vmem:[%s485 + $0x18] sm:$0xff]
        %v490 = vld [vmem:[%s485 + $0x20] sm:$0xff]
        %v491 = vld [vmem:[%s485 + $0x28] sm:$0xff]
        %v492 = vld [vmem:[%s485 + $0x30] sm:$0xff]
        %v493 = vld [vmem:[%s485 + $0x38] sm:$0xff]
        %v494 = vld [vmem:[%s485 + $0x40] sm:$0xff]
        %v495 = vld [vmem:[%s485 + $0x48] sm:$0xff]
        %v496 = vld [vmem:[%s485 + $0x50] sm:$0xff]
        %v497 = vld [vmem:[%s485 + $0x58] sm:$0xff]
        %v498 = vld [vmem:[%s485 + $0x60] sm:$0xff]
        %v499 = vld [vmem:[%s485 + $0x68] sm:$0xff]
        %v500 = vld [vmem:[%s485 + $0x70] sm:$0xff]
        %v501 = vld [vmem:[%s485 + $0x78] sm:$0xff]
        %s502 = scalar_lea.vmem [#allocation6], 4
        %v503 = vld [vmem:[%s502] sm:$0xf]
        %s504 = sld [smem:[#allocation8 + $0x1]]
        %v505 = vstv %s504
        %506 = vmatprep.subr.mxu0 0.0
        %507 = vmatpush1.xpose.msra.mxu0 %v503
        %508 = vmatprep.subr.mxu0 0.0
        %509 = vmatpush1.xpose.msra.mxu0 0.0
        %510 = vmatprep.subr.mxu0 0.0
        %511 = vmatpush1.xpose.msra.mxu0 0.0
        %512 = vmatprep.subr.mxu0 0.0
        %513 = vmatpush1.xpose.msra.mxu0 0.0
        %514 = vmatprep.subr.mxu0 0.0
        %515 = vmatpush1.xpose.msra.mxu0 0.0
        %516 = vmatprep.subr.mxu0 0.0
        %517 = vmatpush1.xpose.msra.mxu0 0.0
        %518 = vmatprep.subr.mxu0 0.0
        %519 = vmatpush1.xpose.msra.mxu0 0.0
        %520 = vmatprep.subr.mxu0 0.0
        %521 = vmatpush1.xpose.msra.mxu0 0.0
        %522 = vmatprep.subr.mxu0 0.0
        %523 = vmatpush1.xpose.msra.mxu0 0.0
        %524 = vmatprep.subr.mxu0 0.0
        %525 = vmatpush1.xpose.msra.mxu0 0.0
        %526 = vmatprep.subr.mxu0 0.0
        %527 = vmatpush1.xpose.msra.mxu0 0.0
        %528 = vmatprep.subr.mxu0 0.0
        %529 = vmatpush1.xpose.msra.mxu0 0.0
        %530 = vmatprep.subr.mxu0 0.0
        %531 = vmatpush1.xpose.msra.mxu0 0.0
        %532 = vmatprep.subr.mxu0 0.0
        %533 = vmatpush1.xpose.msra.mxu0 0.0
        %534 = vmatprep.subr.mxu0 0.0
        %535 = vmatpush1.xpose.msra.mxu0 0.0
        %536 = vmatprep.subr.mxu0 0.0
        %537 = vmatpush1.xpose.msra.mxu0 0.0
        %538 = vmatprep.subr.mxu0 0.0
        %539 = vmatpush1.xpose.msra.mxu0 0.0
        %540 = vmatprep.subr.mxu0 0.0
        %541 = vmatpush1.xpose.msra.mxu0 0.0
        %542 = vmatprep.subr.mxu0 0.0
        %543 = vmatpush1.xpose.msra.mxu0 0.0
        %544 = vmatprep.subr.mxu0 0.0
        %545 = vmatpush1.xpose.msra.mxu0 0.0
        %546 = vmatprep.subr.mxu0 0.0
        %547 = vmatpush1.xpose.msra.mxu0 0.0
        %548 = vmatprep.subr.mxu0 0.0
        %549 = vmatpush1.xpose.msra.mxu0 0.0
        %550 = vmatprep.subr.mxu0 0.0
        %551 = vmatpush1.xpose.msra.mxu0 0.0
        %552 = vmatprep.subr.mxu0 0.0
        %553 = vmatpush1.xpose.msra.mxu0 0.0
        %554 = vmatprep.subr.mxu0 0.0
        %555 = vmatpush1.xpose.msra.mxu0 0.0
        %556 = vmatprep.subr.mxu0 0.0
        %557 = vmatpush1.xpose.msra.mxu0 0.0
        %558 = vmatprep.subr.mxu0 0.0
        %559 = vmatpush1.xpose.msra.mxu0 0.0
        %560 = vmatprep.subr.mxu0 0.0
        %561 = vmatpush1.xpose.msra.mxu0 0.0
        %562 = vmatprep.subr.mxu0 0.0
        %563 = vmatpush1.xpose.msra.mxu0 0.0
        %564 = vmatprep.subr.mxu0 0.0
        %565 = vmatpush1.xpose.msra.mxu0 0.0
        %566 = vmatprep.subr.mxu0 0.0
        %567 = vmatpush1.xpose.msra.mxu0 0.0
        %568 = vmatprep.subr.mxu0 0.0
        %569 = vmatpush1.xpose.msra.mxu0 0.0
        %570 = vmatprep.mubr.f32.mxu0 0.0
        %571 = vmatmul.mubr.f32.gmra.mrb[0].mxu0 %v486
        %v572 = vpop.f32.mrb[0].mxu0
        %v573 = vadd.f32 %v505, %v572
        %v574 = vpop.f32.mrb[0].mxu0
        %575 = vmatprep.mubr.f32.mxu0 0.0
        %576 = vmatmul.mubr.f32.gmra.mrb[0].mxu0 %v487
        %v577 = vpop.f32.mrb[0].mxu0
        %v578 = vadd.f32 %v505, %v577
        %v579 = vpop.f32.mrb[0].mxu0
        %580 = vmatprep.mubr.f32.mxu0 0.0
        %581 = vmatmul.mubr.f32.gmra.mrb[0].mxu0 %v488
        %v582 = vpop.f32.mrb[0].mxu0
        %v583 = vadd.f32 %v505, %v582
        %v584 = vpop.f32.mrb[0].mxu0
        %585 = vmatprep.mubr.f32.mxu0 0.0
        %586 = vmatmul.mubr.f32.gmra.mrb[0].mxu0 %v489
        %v587 = vpop.f32.mrb[0].mxu0
        %v588 = vadd.f32 %v505, %v587
        %v589 = vpop.f32.mrb[0].mxu0
        %590 = vmatprep.mubr.f32.mxu0 0.0
        %591 = vmatmul.mubr.f32.gmra.mrb[0].mxu0 %v490
        %v592 = vpop.f32.mrb[0].mxu0
        %v593 = vadd.f32 %v505, %v592
        %v594 = vpop.f32.mrb[0].mxu0
        %595 = vmatprep.mubr.f32.mxu0 0.0
        %596 = vmatmul.mubr.f32.gmra.mrb[0].mxu0 %v491
        %v597 = vpop.f32.mrb[0].mxu0
        %v598 = vadd.f32 %v505, %v597
        %v599 = vpop.f32.mrb[0].mxu0
        %600 = vmatprep.mubr.f32.mxu0 0.0
        %601 = vmatmul.mubr.f32.gmra.mrb[0].mxu0 %v492
        %v602 = vpop.f32.mrb[0].mxu0
        %v603 = vadd.f32 %v505, %v602
        %v604 = vpop.f32.mrb[0].mxu0
        %605 = vmatprep.mubr.f32.mxu0 0.0
        %606 = vmatmul.mubr.f32.gmra.mrb[0].mxu0 %v493
        %v607 = vpop.f32.mrb[0].mxu0
        %v608 = vadd.f32 %v505, %v607
        %v609 = vpop.f32.mrb[0].mxu0
        %610 = vmatprep.mubr.f32.mxu0 0.0
        %611 = vmatmul.mubr.f32.gmra.mrb[0].mxu0 %v494
        %v612 = vpop.f32.mrb[0].mxu0
        %v613 = vadd.f32 %v505, %v612
        %v614 = vpop.f32.mrb[0].mxu0
        %615 = vmatprep.mubr.f32.mxu0 0.0
        %616 = vmatmul.mubr.f32.gmra.mrb[0].mxu0 %v495
        %v617 = vpop.f32.mrb[0].mxu0
        %v618 = vadd.f32 %v505, %v617
        %v619 = vpop.f32.mrb[0].mxu0
        %620 = vmatprep.mubr.f32.mxu0 0.0
        %621 = vmatmul.mubr.f32.gmra.mrb[0].mxu0 %v496
        %v622 = vpop.f32.mrb[0].mxu0
        %v623 = vadd.f32 %v505, %v622
        %v624 = vpop.f32.mrb[0].mxu0
        %625 = vmatprep.mubr.f32.mxu0 0.0
        %626 = vmatmul.mubr.f32.gmra.mrb[0].mxu0 %v497
        %v627 = vpop.f32.mrb[0].mxu0
        %v628 = vadd.f32 %v505, %v627
        %v629 = vpop.f32.mrb[0].mxu0
        %630 = vmatprep.mubr.f32.mxu0 0.0
        %631 = vmatmul.mubr.f32.gmra.mrb[0].mxu0 %v498
        %v632 = vpop.f32.mrb[0].mxu0
        %v633 = vadd.f32 %v505, %v632
        %v634 = vpop.f32.mrb[0].mxu0
        %635 = vmatprep.mubr.f32.mxu0 0.0
        %636 = vmatmul.mubr.f32.gmra.mrb[0].mxu0 %v499
        %v637 = vpop.f32.mrb[0].mxu0
        %v638 = vadd.f32 %v505, %v637
        %v639 = vpop.f32.mrb[0].mxu0
        %640 = vmatprep.mubr.f32.mxu0 0.0
        %641 = vmatmul.mubr.f32.gmra.mrb[0].mxu0 %v500
        %v642 = vpop.f32.mrb[0].mxu0
        %v643 = vadd.f32 %v505, %v642
        %v644 = vpop.f32.mrb[0].mxu0
        %645 = vmatprep.mubr.f32.mxu0 0.0
        %646 = vmatmul.mubr.f32.gmra.mrb[0].mxu0 %v501
        %v647 = vpop.f32.mrb[0].mxu0
        %v648 = vadd.f32 %v505, %v647
        %v649 = vpop.f32.mrb[0].mxu0
        %650 = vdwg.mxu0
        %v651 = vtanh.pop %v573
        %v652 = vtanh.pop %v578
        %v653 = vtanh.pop %v583
        %v654 = vtanh.pop %v588
        %v655 = vtanh.pop %v593
        %v656 = vtanh.pop %v598
        %v657 = vtanh.pop %v603
        %v658 = vtanh.pop %v608
        %v659 = vtanh.pop %v613
        %v660 = vtanh.pop %v618
        %v661 = vtanh.pop %v623
        %v662 = vtanh.pop %v628
        %v663 = vtanh.pop %v633
        %v664 = vtanh.pop %v638
        %v665 = vtanh.pop %v643
        %v666 = vtanh.pop %v648
        %v667 = vmul.f32 %v651, 1.442695
        %v668 = vpow.pop %v667
        %v669 = vmul.f32 %v652, 1.442695
        %v670 = vpow.pop %v669
        %v671 = vmul.f32 %v653, 1.442695
        %v672 = vpow.pop %v671
        %v673 = vmul.f32 %v654, 1.442695
        %v674 = vpow.pop %v673
        %v675 = vmul.f32 %v655, 1.442695
        %v676 = vpow.pop %v675
        %v677 = vmul.f32 %v656, 1.442695
        %v678 = vpow.pop %v677
        %v679 = vmul.f32 %v657, 1.442695
        %v680 = vpow.pop %v679
        %v681 = vmul.f32 %v658, 1.442695
        %v682 = vpow.pop %v681
        %v683 = vmul.f32 %v659, 1.442695
        %v684 = vpow.pop %v683
        %v685 = vmul.f32 %v660, 1.442695
        %v686 = vpow.pop %v685
        %v687 = vmul.f32 %v661, 1.442695
        %v688 = vpow.pop %v687
        %v689 = vmul.f32 %v662, 1.442695
        %v690 = vpow.pop %v689
        %v691 = vmul.f32 %v663, 1.442695
        %v692 = vpow.pop %v691
        %v693 = vmul.f32 %v664, 1.442695
        %v694 = vpow.pop %v693
        %v695 = vmul.f32 %v665, 1.442695
        %v696 = vpow.pop %v695
        %v697 = vmul.f32 %v666, 1.442695
        %v698 = vpow.pop %v697
        %v699 = vadd.f32 %v454, %v668
        %v700 = vadd.f32 %v456, %v670
        %v701 = vadd.f32 %v458, %v672
        %v702 = vadd.f32 %v460, %v674
        %v703 = vadd.f32 %v462, %v676
        %v704 = vadd.f32 %v464, %v678
        %v705 = vadd.f32 %v466, %v680
        %v706 = vadd.f32 %v468, %v682
        %v707 = vadd.f32 %v470, %v684
        %v708 = vadd.f32 %v472, %v686
        %v709 = vadd.f32 %v474, %v688
        %v710 = vadd.f32 %v476, %v690
        %v711 = vadd.f32 %v478, %v692
        %v712 = vadd.f32 %v480, %v694
        %v713 = vadd.f32 %v482, %v696
        %v714 = vadd.f32 %v484, %v698
        %s715 = scalar_lea.vmem %s236, 256 [#allocation2]
        %v716 = vld [vmem:[%s715] sm:$0xff]
        %v717 = vld [vmem:[%s715 + $0x8] sm:$0xff]
        %v718 = vld [vmem:[%s715 + $0x10] sm:$0xff]
        %v719 = vld [vmem:[%s715 + $0x18] sm:$0xff]
        %v720 = vld [vmem:[%s715 + $0x20] sm:$0xff]
        %v721 = vld [vmem:[%s715 + $0x28] sm:$0xff]
        %v722 = vld [vmem:[%s715 + $0x30] sm:$0xff]
        %v723 = vld [vmem:[%s715 + $0x38] sm:$0xff]
        %v724 = vld [vmem:[%s715 + $0x40] sm:$0xff]
        %v725 = vld [vmem:[%s715 + $0x48] sm:$0xff]
        %v726 = vld [vmem:[%s715 + $0x50] sm:$0xff]
        %v727 = vld [vmem:[%s715 + $0x58] sm:$0xff]
        %v728 = vld [vmem:[%s715 + $0x60] sm:$0xff]
        %v729 = vld [vmem:[%s715 + $0x68] sm:$0xff]
        %v730 = vld [vmem:[%s715 + $0x70] sm:$0xff]
        %v731 = vld [vmem:[%s715 + $0x78] sm:$0xff]
        %s732 = scalar_lea.vmem [#allocation6], 8
        %v733 = vld [vmem:[%s732] sm:$0xf]
        %s734 = sld [smem:[#allocation8 + $0x2]]
        %v735 = vstv %s734
        %736 = vmatprep.subr.mxu0 0.0
        %737 = vmatpush1.xpose.msra.mxu0 %v733
        %738 = vmatprep.subr.mxu0 0.0
        %739 = vmatpush1.xpose.msra.mxu0 0.0
        %740 = vmatprep.subr.mxu0 0.0
        %741 = vmatpush1.xpose.msra.mxu0 0.0
        %742 = vmatprep.subr.mxu0 0.0
        %743 = vmatpush1.xpose.msra.mxu0 0.0
        %744 = vmatprep.subr.mxu0 0.0
        %745 = vmatpush1.xpose.msra.mxu0 0.0
        %746 = vmatprep.subr.mxu0 0.0
        %747 = vmatpush1.xpose.msra.mxu0 0.0
        %748 = vmatprep.subr.mxu0 0.0
        %749 = vmatpush1.xpose.msra.mxu0 0.0
        %750 = vmatprep.subr.mxu0 0.0
        %751 = vmatpush1.xpose.msra.mxu0 0.0
        %752 = vmatprep.subr.mxu0 0.0
        %753 = vmatpush1.xpose.msra.mxu0 0.0
        %754 = vmatprep.subr.mxu0 0.0
        %755 = vmatpush1.xpose.msra.mxu0 0.0
        %756 = vmatprep.subr.mxu0 0.0
        %757 = vmatpush1.xpose.msra.mxu0 0.0
        %758 = vmatprep.subr.mxu0 0.0
        %759 = vmatpush1.xpose.msra.mxu0 0.0
        %760 = vmatprep.subr.mxu0 0.0
        %761 = vmatpush1.xpose.msra.mxu0 0.0
        %762 = vmatprep.subr.mxu0 0.0
        %763 = vmatpush1.xpose.msra.mxu0 0.0
        %764 = vmatprep.subr.mxu0 0.0
        %765 = vmatpush1.xpose.msra.mxu0 0.0
        %766 = vmatprep.subr.mxu0 0.0
        %767 = vmatpush1.xpose.msra.mxu0 0.0
        %768 = vmatprep.subr.mxu0 0.0
        %769 = vmatpush1.xpose.msra.mxu0 0.0
        %770 = vmatprep.subr.mxu0 0.0
        %771 = vmatpush1.xpose.msra.mxu0 0.0
        %772 = vmatprep.subr.mxu0 0.0
        %773 = vmatpush1.xpose.msra.mxu0 0.0
        %774 = vmatprep.subr.mxu0 0.0
        %775 = vmatpush1.xpose.msra.mxu0 0.0
        %776 = vmatprep.subr.mxu0 0.0
        %777 = vmatpush1.xpose.msra.mxu0 0.0
        %778 = vmatprep.subr.mxu0 0.0
        %779 = vmatpush1.xpose.msra.mxu0 0.0
        %780 = vmatprep.subr.mxu0 0.0
        %781 = vmatpush1.xpose.msra.mxu0 0.0
        %782 = vmatprep.subr.mxu0 0.0
        %783 = vmatpush1.xpose.msra.mxu0 0.0
        %784 = vmatprep.subr.mxu0 0.0
        %785 = vmatpush1.xpose.msra.mxu0 0.0
        %786 = vmatprep.subr.mxu0 0.0
        %787 = vmatpush1.xpose.msra.mxu0 0.0
        %788 = vmatprep.subr.mxu0 0.0
        %789 = vmatpush1.xpose.msra.mxu0 0.0
        %790 = vmatprep.subr.mxu0 0.0
        %791 = vmatpush1.xpose.msra.mxu0 0.0
        %792 = vmatprep.subr.mxu0 0.0
        %793 = vmatpush1.xpose.msra.mxu0 0.0
        %794 = vmatprep.subr.mxu0 0.0
        %795 = vmatpush1.xpose.msra.mxu0 0.0
        %796 = vmatprep.subr.mxu0 0.0
        %797 = vmatpush1.xpose.msra.mxu0 0.0
        %798 = vmatprep.subr.mxu0 0.0
        %799 = vmatpush1.xpose.msra.mxu0 0.0
        %800 = vmatprep.mubr.f32.mxu0 0.0
        %801 = vmatmul.mubr.f32.gmra.mrb[0].mxu0 %v716
        %v802 = vpop.f32.mrb[0].mxu0
        %v803 = vadd.f32 %v735, %v802
        %v804 = vpop.f32.mrb[0].mxu0
        %805 = vmatprep.mubr.f32.mxu0 0.0
        %806 = vmatmul.mubr.f32.gmra.mrb[0].mxu0 %v717
        %v807 = vpop.f32.mrb[0].mxu0
        %v808 = vadd.f32 %v735, %v807
        %v809 = vpop.f32.mrb[0].mxu0
        %810 = vmatprep.mubr.f32.mxu0 0.0
        %811 = vmatmul.mubr.f32.gmra.mrb[0].mxu0 %v718
        %v812 = vpop.f32.mrb[0].mxu0
        %v813 = vadd.f32 %v735, %v812
        %v814 = vpop.f32.mrb[0].mxu0
        %815 = vmatprep.mubr.f32.mxu0 0.0
        %816 = vmatmul.mubr.f32.gmra.mrb[0].mxu0 %v719
        %v817 = vpop.f32.mrb[0].mxu0
        %v818 = vadd.f32 %v735, %v817
        %v819 = vpop.f32.mrb[0].mxu0
        %820 = vmatprep.mubr.f32.mxu0 0.0
        %821 = vmatmul.mubr.f32.gmra.mrb[0].mxu0 %v720
        %v822 = vpop.f32.mrb[0].mxu0
        %v823 = vadd.f32 %v735, %v822
        %v824 = vpop.f32.mrb[0].mxu0
        %825 = vmatprep.mubr.f32.mxu0 0.0
        %826 = vmatmul.mubr.f32.gmra.mrb[0].mxu0 %v721
        %v827 = vpop.f32.mrb[0].mxu0
        %v828 = vadd.f32 %v735, %v827
        %v829 = vpop.f32.mrb[0].mxu0
        %830 = vmatprep.mubr.f32.mxu0 0.0
        %831 = vmatmul.mubr.f32.gmra.mrb[0].mxu0 %v722
        %v832 = vpop.f32.mrb[0].mxu0
        %v833 = vadd.f32 %v735, %v832
        %v834 = vpop.f32.mrb[0].mxu0
        %835 = vmatprep.mubr.f32.mxu0 0.0
        %836 = vmatmul.mubr.f32.gmra.mrb[0].mxu0 %v723
        %v837 = vpop.f32.mrb[0].mxu0
        %v838 = vadd.f32 %v735, %v837
        %v839 = vpop.f32.mrb[0].mxu0
        %840 = vmatprep.mubr.f32.mxu0 0.0
        %841 = vmatmul.mubr.f32.gmra.mrb[0].mxu0 %v724
        %v842 = vpop.f32.mrb[0].mxu0
        %v843 = vadd.f32 %v735, %v842
        %v844 = vpop.f32.mrb[0].mxu0
        %845 = vmatprep.mubr.f32.mxu0 0.0
        %846 = vmatmul.mubr.f32.gmra.mrb[0].mxu0 %v725
        %v847 = vpop.f32.mrb[0].mxu0
        %v848 = vadd.f32 %v735, %v847
        %v849 = vpop.f32.mrb[0].mxu0
        %850 = vmatprep.mubr.f32.mxu0 0.0
        %851 = vmatmul.mubr.f32.gmra.mrb[0].mxu0 %v726
        %v852 = vpop.f32.mrb[0].mxu0
        %v853 = vadd.f32 %v735, %v852
        %v854 = vpop.f32.mrb[0].mxu0
        %855 = vmatprep.mubr.f32.mxu0 0.0
        %856 = vmatmul.mubr.f32.gmra.mrb[0].mxu0 %v727
        %v857 = vpop.f32.mrb[0].mxu0
        %v858 = vadd.f32 %v735, %v857
        %v859 = vpop.f32.mrb[0].mxu0
        %860 = vmatprep.mubr.f32.mxu0 0.0
        %861 = vmatmul.mubr.f32.gmra.mrb[0].mxu0 %v728
        %v862 = vpop.f32.mrb[0].mxu0
        %v863 = vadd.f32 %v735, %v862
        %v864 = vpop.f32.mrb[0].mxu0
        %865 = vmatprep.mubr.f32.mxu0 0.0
        %866 = vmatmul.mubr.f32.gmra.mrb[0].mxu0 %v729
        %v867 = vpop.f32.mrb[0].mxu0
        %v868 = vadd.f32 %v735, %v867
        %v869 = vpop.f32.mrb[0].mxu0
        %870 = vmatprep.mubr.f32.mxu0 0.0
        %871 = vmatmul.mubr.f32.gmra.mrb[0].mxu0 %v730
        %v872 = vpop.f32.mrb[0].mxu0
        %v873 = vadd.f32 %v735, %v872
        %v874 = vpop.f32.mrb[0].mxu0
        %875 = vmatprep.mubr.f32.mxu0 0.0
        %876 = vmatmul.mubr.f32.gmra.mrb[0].mxu0 %v731
        %v877 = vpop.f32.mrb[0].mxu0
        %v878 = vadd.f32 %v735, %v877
        %v879 = vpop.f32.mrb[0].mxu0
        %880 = vdwg.mxu0
        %v881 = vtanh.pop %v803
        %v882 = vtanh.pop %v808
        %v883 = vtanh.pop %v813
        %v884 = vtanh.pop %v818
        %v885 = vtanh.pop %v823
        %v886 = vtanh.pop %v828
        %v887 = vtanh.pop %v833
        %v888 = vtanh.pop %v838
        %v889 = vtanh.pop %v843
        %v890 = vtanh.pop %v848
        %v891 = vtanh.pop %v853
        %v892 = vtanh.pop %v858
        %v893 = vtanh.pop %v863
        %v894 = vtanh.pop %v868
        %v895 = vtanh.pop %v873
        %v896 = vtanh.pop %v878
        %v897 = vmul.f32 %v881, 1.442695
        %v898 = vpow.pop %v897
        %v899 = vmul.f32 %v882, 1.442695
        %v900 = vpow.pop %v899
        %v901 = vmul.f32 %v883, 1.442695
        %v902 = vpow.pop %v901
        %v903 = vmul.f32 %v884, 1.442695
        %v904 = vpow.pop %v903
        %v905 = vmul.f32 %v885, 1.442695
        %v906 = vpow.pop %v905
        %v907 = vmul.f32 %v886, 1.442695
        %v908 = vpow.pop %v907
        %v909 = vmul.f32 %v887, 1.442695
        %v910 = vpow.pop %v909
        %v911 = vmul.f32 %v888, 1.442695
        %v912 = vpow.pop %v911
        %v913 = vmul.f32 %v889, 1.442695
        %v914 = vpow.pop %v913
        %v915 = vmul.f32 %v890, 1.442695
        %v916 = vpow.pop %v915
        %v917 = vmul.f32 %v891, 1.442695
        %v918 = vpow.pop %v917
        %v919 = vmul.f32 %v892, 1.442695
        %v920 = vpow.pop %v919
        %v921 = vmul.f32 %v893, 1.442695
        %v922 = vpow.pop %v921
        %v923 = vmul.f32 %v894, 1.442695
        %v924 = vpow.pop %v923
        %v925 = vmul.f32 %v895, 1.442695
        %v926 = vpow.pop %v925
        %v927 = vmul.f32 %v896, 1.442695
        %v928 = vpow.pop %v927
        %v929 = vadd.f32 %v699, %v898
        %v930 = vadd.f32 %v700, %v900
        %v931 = vadd.f32 %v701, %v902
        %v932 = vadd.f32 %v702, %v904
        %v933 = vadd.f32 %v703, %v906
        %v934 = vadd.f32 %v704, %v908
        %v935 = vadd.f32 %v705, %v910
        %v936 = vadd.f32 %v706, %v912
        %v937 = vadd.f32 %v707, %v914
        %v938 = vadd.f32 %v708, %v916
        %v939 = vadd.f32 %v709, %v918
        %v940 = vadd.f32 %v710, %v920
        %v941 = vadd.f32 %v711, %v922
        %v942 = vadd.f32 %v712, %v924
        %v943 = vadd.f32 %v713, %v926
        %v944 = vadd.f32 %v714, %v928
        %v945 = vrcp.pop %v929
        %v946 = vrcp.pop %v930
        %v947 = vrcp.pop %v931
        %v948 = vrcp.pop %v932
        %v949 = vrcp.pop %v933
        %v950 = vrcp.pop %v934
        %v951 = vrcp.pop %v935
        %v952 = vrcp.pop %v936
        %v953 = vrcp.pop %v937
        %v954 = vrcp.pop %v938
        %v955 = vrcp.pop %v939
        %v956 = vrcp.pop %v940
        %v957 = vrcp.pop %v941
        %v958 = vrcp.pop %v942
        %v959 = vrcp.pop %v943
        %v960 = vrcp.pop %v944
        %v961 = vmul.f32 %v454, %v945
        %v962 = vmul.f32 %v456, %v946
        %v963 = vmul.f32 %v458, %v947
        %v964 = vmul.f32 %v460, %v948
        %v965 = vmul.f32 %v462, %v949
        %v966 = vmul.f32 %v464, %v950
        %v967 = vmul.f32 %v466, %v951
        %v968 = vmul.f32 %v468, %v952
        %v969 = vmul.f32 %v470, %v953
        %v970 = vmul.f32 %v472, %v954
        %v971 = vmul.f32 %v474, %v955
        %v972 = vmul.f32 %v476, %v956
        %v973 = vmul.f32 %v478, %v957
        %v974 = vmul.f32 %v480, %v958
        %v975 = vmul.f32 %v482, %v959
        %v976 = vmul.f32 %v484, %v960
        %vm977 = vcmask 31744
        %v979 = vsel %vm977, %v961, 0
        %v982 = vsel %vm977, %v962, 0
        %v985 = vsel %vm977, %v963, 0
        %v988 = vsel %vm977, %v964, 0
        %v991 = vsel %vm977, %v965, 0
        %v994 = vsel %vm977, %v966, 0
        %v997 = vsel %vm977, %v967, 0
        %v1000 = vsel %vm977, %v968, 0
        %v1003 = vsel %vm977, %v969, 0
        %v1006 = vsel %vm977, %v970, 0
        %v1009 = vsel %vm977, %v971, 0
        %v1012 = vsel %vm977, %v972, 0
        %v1015 = vsel %vm977, %v973, 0
        %v1018 = vsel %vm977, %v974, 0
        %v1021 = vsel %vm977, %v975, 0
        %v1024 = vsel %vm977, %v976, 0
        %vm1026 = vcmask 1043456
        %v1028 = vsel %vm1026, %v272, 0
        %1030 = vmatprep.subr.mxu0 0.0
        %1031 = vmatpush1.msra.mxu0 %v1028
        %1032 = vmatprep.subr.mxu0 0.0
        %1033 = vmatpush1.msra.mxu0 0.0
        %1034 = vmatprep.subr.mxu0 0.0
        %1035 = vmatpush1.msra.mxu0 0.0
        %1036 = vmatprep.subr.mxu0 0.0
        %1037 = vmatpush1.msra.mxu0 0.0
        %1038 = vmatprep.subr.mxu0 0.0
        %1039 = vmatpush1.msra.mxu0 0.0
        %1040 = vmatprep.subr.mxu0 0.0
        %1041 = vmatpush1.msra.mxu0 0.0
        %1042 = vmatprep.subr.mxu0 0.0
        %1043 = vmatpush1.msra.mxu0 0.0
        %1044 = vmatprep.subr.mxu0 0.0
        %1045 = vmatpush1.msra.mxu0 0.0
        %1046 = vmatprep.subr.mxu0 0.0
        %1047 = vmatpush1.msra.mxu0 0.0
        %1048 = vmatprep.subr.mxu0 0.0
        %1049 = vmatpush1.msra.mxu0 0.0
        %1050 = vmatprep.subr.mxu0 0.0
        %1051 = vmatpush1.msra.mxu0 0.0
        %1052 = vmatprep.subr.mxu0 0.0
        %1053 = vmatpush1.msra.mxu0 0.0
        %1054 = vmatprep.subr.mxu0 0.0
        %1055 = vmatpush1.msra.mxu0 0.0
        %1056 = vmatprep.subr.mxu0 0.0
        %1057 = vmatpush1.msra.mxu0 0.0
        %1058 = vmatprep.subr.mxu0 0.0
        %1059 = vmatpush1.msra.mxu0 0.0
        %1060 = vmatprep.subr.mxu0 0.0
        %1061 = vmatpush1.msra.mxu0 0.0
        %1062 = vmatprep.subr.mxu0 0.0
        %1063 = vmatpush1.msra.mxu0 0.0
        %1064 = vmatprep.subr.mxu0 0.0
        %1065 = vmatpush1.msra.mxu0 0.0
        %1066 = vmatprep.subr.mxu0 0.0
        %1067 = vmatpush1.msra.mxu0 0.0
        %1068 = vmatprep.subr.mxu0 0.0
        %1069 = vmatpush1.msra.mxu0 0.0
        %1070 = vmatprep.subr.mxu0 0.0
        %1071 = vmatpush1.msra.mxu0 0.0
        %1072 = vmatprep.subr.mxu0 0.0
        %1073 = vmatpush1.msra.mxu0 0.0
        %1074 = vmatprep.subr.mxu0 0.0
        %1075 = vmatpush1.msra.mxu0 0.0
        %1076 = vmatprep.subr.mxu0 0.0
        %1077 = vmatpush1.msra.mxu0 0.0
        %1078 = vmatprep.subr.mxu0 0.0
        %1079 = vmatpush1.msra.mxu0 0.0
        %1080 = vmatprep.subr.mxu0 0.0
        %1081 = vmatpush1.msra.mxu0 0.0
        %1082 = vmatprep.subr.mxu0 0.0
        %1083 = vmatpush1.msra.mxu0 0.0
        %1084 = vmatprep.subr.mxu0 0.0
        %1085 = vmatpush1.msra.mxu0 0.0
        %1086 = vmatprep.subr.mxu0 0.0
        %1087 = vmatpush1.msra.mxu0 0.0
        %1088 = vmatprep.subr.mxu0 0.0
        %1089 = vmatpush1.msra.mxu0 0.0
        %1090 = vmatprep.subr.mxu0 0.0
        %1091 = vmatpush1.msra.mxu0 0.0
        %1092 = vmatprep.subr.mxu0 0.0
        %1093 = vmatpush1.msra.mxu0 0.0
        %1094 = vmatprep.mubr.f32.mxu0 0.0
        %1095 = vmatmul.mubr.f32.gmra.mrb[0].mxu0 %v979
        %v1096 = vpop.f32.mrb[0].mxu0
        %v1097 = vadd.f32 0.0, %v1096
        %v1098 = vpop.f32.mrb[0].mxu0
        %1099 = vmatprep.mubr.f32.mxu0 0.0
        %1100 = vmatmul.mubr.f32.gmra.mrb[0].mxu0 %v982
        %v1101 = vpop.f32.mrb[0].mxu0
        %v1102 = vadd.f32 0.0, %v1101
        %v1103 = vpop.f32.mrb[0].mxu0
        %1104 = vmatprep.mubr.f32.mxu0 0.0
        %1105 = vmatmul.mubr.f32.gmra.mrb[0].mxu0 %v985
        %v1106 = vpop.f32.mrb[0].mxu0
        %v1107 = vadd.f32 0.0, %v1106
        %v1108 = vpop.f32.mrb[0].mxu0
        %1109 = vmatprep.mubr.f32.mxu0 0.0
        %1110 = vmatmul.mubr.f32.gmra.mrb[0].mxu0 %v988
        %v1111 = vpop.f32.mrb[0].mxu0
        %v1112 = vadd.f32 0.0, %v1111
        %v1113 = vpop.f32.mrb[0].mxu0
        %1114 = vmatprep.mubr.f32.mxu0 0.0
        %1115 = vmatmul.mubr.f32.gmra.mrb[0].mxu0 %v991
        %v1116 = vpop.f32.mrb[0].mxu0
        %v1117 = vadd.f32 0.0, %v1116
        %v1118 = vpop.f32.mrb[0].mxu0
        %1119 = vmatprep.mubr.f32.mxu0 0.0
        %1120 = vmatmul.mubr.f32.gmra.mrb[0].mxu0 %v994
        %v1121 = vpop.f32.mrb[0].mxu0
        %v1122 = vadd.f32 0.0, %v1121
        %v1123 = vpop.f32.mrb[0].mxu0
        %1124 = vmatprep.mubr.f32.mxu0 0.0
        %1125 = vmatmul.mubr.f32.gmra.mrb[0].mxu0 %v997
        %v1126 = vpop.f32.mrb[0].mxu0
        %v1127 = vadd.f32 0.0, %v1126
        %v1128 = vpop.f32.mrb[0].mxu0
        %1129 = vmatprep.mubr.f32.mxu0 0.0
        %1130 = vmatmul.mubr.f32.gmra.mrb[0].mxu0 %v1000
        %v1131 = vpop.f32.mrb[0].mxu0
        %v1132 = vadd.f32 0.0, %v1131
        %v1133 = vpop.f32.mrb[0].mxu0
        %1134 = vmatprep.mubr.f32.mxu0 0.0
        %1135 = vmatmul.mubr.f32.gmra.mrb[0].mxu0 %v1003
        %v1136 = vpop.f32.mrb[0].mxu0
        %v1137 = vadd.f32 0.0, %v1136
        %v1138 = vpop.f32.mrb[0].mxu0
        %1139 = vmatprep.mubr.f32.mxu0 0.0
        %1140 = vmatmul.mubr.f32.gmra.mrb[0].mxu0 %v1006
        %v1141 = vpop.f32.mrb[0].mxu0
        %v1142 = vadd.f32 0.0, %v1141
        %v1143 = vpop.f32.mrb[0].mxu0
        %1144 = vmatprep.mubr.f32.mxu0 0.0
        %1145 = vmatmul.mubr.f32.gmra.mrb[0].mxu0 %v1009
        %v1146 = vpop.f32.mrb[0].mxu0
        %v1147 = vadd.f32 0.0, %v1146
        %v1148 = vpop.f32.mrb[0].mxu0
        %1149 = vmatprep.mubr.f32.mxu0 0.0
        %1150 = vmatmul.mubr.f32.gmra.mrb[0].mxu0 %v1012
        %v1151 = vpop.f32.mrb[0].mxu0
        %v1152 = vadd.f32 0.0, %v1151
        %v1153 = vpop.f32.mrb[0].mxu0
        %1154 = vmatprep.mubr.f32.mxu0 0.0
        %1155 = vmatmul.mubr.f32.gmra.mrb[0].mxu0 %v1015
        %v1156 = vpop.f32.mrb[0].mxu0
        %v1157 = vadd.f32 0.0, %v1156
        %v1158 = vpop.f32.mrb[0].mxu0
        %1159 = vmatprep.mubr.f32.mxu0 0.0
        %1160 = vmatmul.mubr.f32.gmra.mrb[0].mxu0 %v1018
        %v1161 = vpop.f32.mrb[0].mxu0
        %v1162 = vadd.f32 0.0, %v1161
        %v1163 = vpop.f32.mrb[0].mxu0
        %1164 = vmatprep.mubr.f32.mxu0 0.0
        %1165 = vmatmul.mubr.f32.gmra.mrb[0].mxu0 %v1021
        %v1166 = vpop.f32.mrb[0].mxu0
        %v1167 = vadd.f32 0.0, %v1166
        %v1168 = vpop.f32.mrb[0].mxu0
        %1169 = vmatprep.mubr.f32.mxu0 0.0
        %1170 = vmatmul.mubr.f32.gmra.mrb[0].mxu0 %v1024
        %v1171 = vpop.f32.mrb[0].mxu0
        %v1172 = vadd.f32 0.0, %v1171
        %v1173 = vpop.f32.mrb[0].mxu0
        %1174 = vdwg.mxu0
        %v1175 = vmul.f32 %v1097, %v273
        %v1176 = vmul.f32 %v1102, %v274
        %v1177 = vmul.f32 %v1107, %v275
        %v1178 = vmul.f32 %v1112, %v276
        %v1179 = vmul.f32 %v1117, %v277
        %v1180 = vmul.f32 %v1122, %v278
        %v1181 = vmul.f32 %v1127, %v279
        %v1182 = vmul.f32 %v1132, %v280
        %v1183 = vmul.f32 %v1137, %v281
        %v1184 = vmul.f32 %v1142, %v282
        %v1185 = vmul.f32 %v1147, %v283
        %v1186 = vmul.f32 %v1152, %v284
        %v1187 = vmul.f32 %v1157, %v285
        %v1188 = vmul.f32 %v1162, %v286
        %v1189 = vmul.f32 %v1167, %v287
        %v1190 = vmul.f32 %v1172, %v288
        %v1191 = vmul.f32 %v668, %v945
        %v1192 = vmul.f32 %v670, %v946
        %v1193 = vmul.f32 %v672, %v947
        %v1194 = vmul.f32 %v674, %v948
        %v1195 = vmul.f32 %v676, %v949
        %v1196 = vmul.f32 %v678, %v950
        %v1197 = vmul.f32 %v680, %v951
        %v1198 = vmul.f32 %v682, %v952
        %v1199 = vmul.f32 %v684, %v953
        %v1200 = vmul.f32 %v686, %v954
        %v1201 = vmul.f32 %v688, %v955
        %v1202 = vmul.f32 %v690, %v956
        %v1203 = vmul.f32 %v692, %v957
        %v1204 = vmul.f32 %v694, %v958
        %v1205 = vmul.f32 %v696, %v959
        %v1206 = vmul.f32 %v698, %v960
        %v1208 = vsel %vm977, %v1191, 0
        %v1211 = vsel %vm977, %v1192, 0
        %v1214 = vsel %vm977, %v1193, 0
        %v1217 = vsel %vm977, %v1194, 0
        %v1220 = vsel %vm977, %v1195, 0
        %v1223 = vsel %vm977, %v1196, 0
        %v1226 = vsel %vm977, %v1197, 0
        %v1229 = vsel %vm977, %v1198, 0
        %v1232 = vsel %vm977, %v1199, 0
        %v1235 = vsel %vm977, %v1200, 0
        %v1238 = vsel %vm977, %v1201, 0
        %v1241 = vsel %vm977, %v1202, 0
        %v1244 = vsel %vm977, %v1203, 0
        %v1247 = vsel %vm977, %v1204, 0
        %v1250 = vsel %vm977, %v1205, 0
        %v1253 = vsel %vm977, %v1206, 0
        %1255 = vmatprep.subr.mxu0 0.0
        %1256 = vmatpush1.msra.mxu0 %v1028
        %1257 = vmatprep.subr.mxu0 0.0
        %1258 = vmatpush1.msra.mxu0 0.0
        %1259 = vmatprep.subr.mxu0 0.0
        %1260 = vmatpush1.msra.mxu0 0.0
        %1261 = vmatprep.subr.mxu0 0.0
        %1262 = vmatpush1.msra.mxu0 0.0
        %1263 = vmatprep.subr.mxu0 0.0
        %1264 = vmatpush1.msra.mxu0 0.0
        %1265 = vmatprep.subr.mxu0 0.0
        %1266 = vmatpush1.msra.mxu0 0.0
        %1267 = vmatprep.subr.mxu0 0.0
        %1268 = vmatpush1.msra.mxu0 0.0
        %1269 = vmatprep.subr.mxu0 0.0
        %1270 = vmatpush1.msra.mxu0 0.0
        %1271 = vmatprep.subr.mxu0 0.0
        %1272 = vmatpush1.msra.mxu0 0.0
        %1273 = vmatprep.subr.mxu0 0.0
        %1274 = vmatpush1.msra.mxu0 0.0
        %1275 = vmatprep.subr.mxu0 0.0
        %1276 = vmatpush1.msra.mxu0 0.0
        %1277 = vmatprep.subr.mxu0 0.0
        %1278 = vmatpush1.msra.mxu0 0.0
        %1279 = vmatprep.subr.mxu0 0.0
        %1280 = vmatpush1.msra.mxu0 0.0
        %1281 = vmatprep.subr.mxu0 0.0
        %1282 = vmatpush1.msra.mxu0 0.0
        %1283 = vmatprep.subr.mxu0 0.0
        %1284 = vmatpush1.msra.mxu0 0.0
        %1285 = vmatprep.subr.mxu0 0.0
        %1286 = vmatpush1.msra.mxu0 0.0
        %1287 = vmatprep.subr.mxu0 0.0
        %1288 = vmatpush1.msra.mxu0 0.0
        %1289 = vmatprep.subr.mxu0 0.0
        %1290 = vmatpush1.msra.mxu0 0.0
        %1291 = vmatprep.subr.mxu0 0.0
        %1292 = vmatpush1.msra.mxu0 0.0
        %1293 = vmatprep.subr.mxu0 0.0
        %1294 = vmatpush1.msra.mxu0 0.0
        %1295 = vmatprep.subr.mxu0 0.0
        %1296 = vmatpush1.msra.mxu0 0.0
        %1297 = vmatprep.subr.mxu0 0.0
        %1298 = vmatpush1.msra.mxu0 0.0
        %1299 = vmatprep.subr.mxu0 0.0
        %1300 = vmatpush1.msra.mxu0 0.0
        %1301 = vmatprep.subr.mxu0 0.0
        %1302 = vmatpush1.msra.mxu0 0.0
        %1303 = vmatprep.subr.mxu0 0.0
        %1304 = vmatpush1.msra.mxu0 0.0
        %1305 = vmatprep.subr.mxu0 0.0
        %1306 = vmatpush1.msra.mxu0 0.0
        %1307 = vmatprep.subr.mxu0 0.0
        %1308 = vmatpush1.msra.mxu0 0.0
        %1309 = vmatprep.subr.mxu0 0.0
        %1310 = vmatpush1.msra.mxu0 0.0
        %1311 = vmatprep.subr.mxu0 0.0
        %1312 = vmatpush1.msra.mxu0 0.0
        %1313 = vmatprep.subr.mxu0 0.0
        %1314 = vmatpush1.msra.mxu0 0.0
        %1315 = vmatprep.subr.mxu0 0.0
        %1316 = vmatpush1.msra.mxu0 0.0
        %1317 = vmatprep.subr.mxu0 0.0
        %1318 = vmatpush1.msra.mxu0 0.0
        %1319 = vmatprep.mubr.f32.mxu0 0.0
        %1320 = vmatmul.mubr.f32.gmra.mrb[0].mxu0 %v1208
        %v1321 = vpop.f32.mrb[0].mxu0
        %v1322 = vadd.f32 0.0, %v1321
        %v1323 = vpop.f32.mrb[0].mxu0
        %1324 = vmatprep.mubr.f32.mxu0 0.0
        %1325 = vmatmul.mubr.f32.gmra.mrb[0].mxu0 %v1211
        %v1326 = vpop.f32.mrb[0].mxu0
        %v1327 = vadd.f32 0.0, %v1326
        %v1328 = vpop.f32.mrb[0].mxu0
        %1329 = vmatprep.mubr.f32.mxu0 0.0
        %1330 = vmatmul.mubr.f32.gmra.mrb[0].mxu0 %v1214
        %v1331 = vpop.f32.mrb[0].mxu0
        %v1332 = vadd.f32 0.0, %v1331
        %v1333 = vpop.f32.mrb[0].mxu0
        %1334 = vmatprep.mubr.f32.mxu0 0.0
        %1335 = vmatmul.mubr.f32.gmra.mrb[0].mxu0 %v1217
        %v1336 = vpop.f32.mrb[0].mxu0
        %v1337 = vadd.f32 0.0, %v1336
        %v1338 = vpop.f32.mrb[0].mxu0
        %1339 = vmatprep.mubr.f32.mxu0 0.0
        %1340 = vmatmul.mubr.f32.gmra.mrb[0].mxu0 %v1220
        %v1341 = vpop.f32.mrb[0].mxu0
        %v1342 = vadd.f32 0.0, %v1341
        %v1343 = vpop.f32.mrb[0].mxu0
        %1344 = vmatprep.mubr.f32.mxu0 0.0
        %1345 = vmatmul.mubr.f32.gmra.mrb[0].mxu0 %v1223
        %v1346 = vpop.f32.mrb[0].mxu0
        %v1347 = vadd.f32 0.0, %v1346
        %v1348 = vpop.f32.mrb[0].mxu0
        %1349 = vmatprep.mubr.f32.mxu0 0.0
        %1350 = vmatmul.mubr.f32.gmra.mrb[0].mxu0 %v1226
        %v1351 = vpop.f32.mrb[0].mxu0
        %v1352 = vadd.f32 0.0, %v1351
        %v1353 = vpop.f32.mrb[0].mxu0
        %1354 = vmatprep.mubr.f32.mxu0 0.0
        %1355 = vmatmul.mubr.f32.gmra.mrb[0].mxu0 %v1229
        %v1356 = vpop.f32.mrb[0].mxu0
        %v1357 = vadd.f32 0.0, %v1356
        %v1358 = vpop.f32.mrb[0].mxu0
        %1359 = vmatprep.mubr.f32.mxu0 0.0
        %1360 = vmatmul.mubr.f32.gmra.mrb[0].mxu0 %v1232
        %v1361 = vpop.f32.mrb[0].mxu0
        %v1362 = vadd.f32 0.0, %v1361
        %v1363 = vpop.f32.mrb[0].mxu0
        %1364 = vmatprep.mubr.f32.mxu0 0.0
        %1365 = vmatmul.mubr.f32.gmra.mrb[0].mxu0 %v1235
        %v1366 = vpop.f32.mrb[0].mxu0
        %v1367 = vadd.f32 0.0, %v1366
        %v1368 = vpop.f32.mrb[0].mxu0
        %1369 = vmatprep.mubr.f32.mxu0 0.0
        %1370 = vmatmul.mubr.f32.gmra.mrb[0].mxu0 %v1238
        %v1371 = vpop.f32.mrb[0].mxu0
        %v1372 = vadd.f32 0.0, %v1371
        %v1373 = vpop.f32.mrb[0].mxu0
        %1374 = vmatprep.mubr.f32.mxu0 0.0
        %1375 = vmatmul.mubr.f32.gmra.mrb[0].mxu0 %v1241
        %v1376 = vpop.f32.mrb[0].mxu0
        %v1377 = vadd.f32 0.0, %v1376
        %v1378 = vpop.f32.mrb[0].mxu0
        %1379 = vmatprep.mubr.f32.mxu0 0.0
        %1380 = vmatmul.mubr.f32.gmra.mrb[0].mxu0 %v1244
        %v1381 = vpop.f32.mrb[0].mxu0
        %v1382 = vadd.f32 0.0, %v1381
        %v1383 = vpop.f32.mrb[0].mxu0
        %1384 = vmatprep.mubr.f32.mxu0 0.0
        %1385 = vmatmul.mubr.f32.gmra.mrb[0].mxu0 %v1247
        %v1386 = vpop.f32.mrb[0].mxu0
        %v1387 = vadd.f32 0.0, %v1386
        %v1388 = vpop.f32.mrb[0].mxu0
        %1389 = vmatprep.mubr.f32.mxu0 0.0
        %1390 = vmatmul.mubr.f32.gmra.mrb[0].mxu0 %v1250
        %v1391 = vpop.f32.mrb[0].mxu0
        %v1392 = vadd.f32 0.0, %v1391
        %v1393 = vpop.f32.mrb[0].mxu0
        %1394 = vmatprep.mubr.f32.mxu0 0.0
        %1395 = vmatmul.mubr.f32.gmra.mrb[0].mxu0 %v1253
        %v1396 = vpop.f32.mrb[0].mxu0
        %v1397 = vadd.f32 0.0, %v1396
        %v1398 = vpop.f32.mrb[0].mxu0
        %1399 = vdwg.mxu0
        %v1400 = vmul.f32 %v1322, %v486
        %v1401 = vmul.f32 %v1327, %v487
        %v1402 = vmul.f32 %v1332, %v488
        %v1403 = vmul.f32 %v1337, %v489
        %v1404 = vmul.f32 %v1342, %v490
        %v1405 = vmul.f32 %v1347, %v491
        %v1406 = vmul.f32 %v1352, %v492
        %v1407 = vmul.f32 %v1357, %v493
        %v1408 = vmul.f32 %v1362, %v494
        %v1409 = vmul.f32 %v1367, %v495
        %v1410 = vmul.f32 %v1372, %v496
        %v1411 = vmul.f32 %v1377, %v497
        %v1412 = vmul.f32 %v1382, %v498
        %v1413 = vmul.f32 %v1387, %v499
        %v1414 = vmul.f32 %v1392, %v500
        %v1415 = vmul.f32 %v1397, %v501
        %v1416 = vadd.f32 %v1175, %v1400
        %v1417 = vadd.f32 %v1176, %v1401
        %v1418 = vadd.f32 %v1177, %v1402
        %v1419 = vadd.f32 %v1178, %v1403
        %v1420 = vadd.f32 %v1179, %v1404
        %v1421 = vadd.f32 %v1180, %v1405
        %v1422 = vadd.f32 %v1181, %v1406
        %v1423 = vadd.f32 %v1182, %v1407
        %v1424 = vadd.f32 %v1183, %v1408
        %v1425 = vadd.f32 %v1184, %v1409
        %v1426 = vadd.f32 %v1185, %v1410
        %v1427 = vadd.f32 %v1186, %v1411
        %v1428 = vadd.f32 %v1187, %v1412
        %v1429 = vadd.f32 %v1188, %v1413
        %v1430 = vadd.f32 %v1189, %v1414
        %v1431 = vadd.f32 %v1190, %v1415
        %v1432 = vmul.f32 %v898, %v945
        %v1433 = vmul.f32 %v900, %v946
        %v1434 = vmul.f32 %v902, %v947
        %v1435 = vmul.f32 %v904, %v948
        %v1436 = vmul.f32 %v906, %v949
        %v1437 = vmul.f32 %v908, %v950
        %v1438 = vmul.f32 %v910, %v951
        %v1439 = vmul.f32 %v912, %v952
        %v1440 = vmul.f32 %v914, %v953
        %v1441 = vmul.f32 %v916, %v954
        %v1442 = vmul.f32 %v918, %v955
        %v1443 = vmul.f32 %v920, %v956
        %v1444 = vmul.f32 %v922, %v957
        %v1445 = vmul.f32 %v924, %v958
        %v1446 = vmul.f32 %v926, %v959
        %v1447 = vmul.f32 %v928, %v960
        %v1449 = vsel %vm977, %v1432, 0
        %v1452 = vsel %vm977, %v1433, 0
        %v1455 = vsel %vm977, %v1434, 0
        %v1458 = vsel %vm977, %v1435, 0
        %v1461 = vsel %vm977, %v1436, 0
        %v1464 = vsel %vm977, %v1437, 0
        %v1467 = vsel %vm977, %v1438, 0
        %v1470 = vsel %vm977, %v1439, 0
        %v1473 = vsel %vm977, %v1440, 0
        %v1476 = vsel %vm977, %v1441, 0
        %v1479 = vsel %vm977, %v1442, 0
        %v1482 = vsel %vm977, %v1443, 0
        %v1485 = vsel %vm977, %v1444, 0
        %v1488 = vsel %vm977, %v1445, 0
        %v1491 = vsel %vm977, %v1446, 0
        %v1494 = vsel %vm977, %v1447, 0
        %1496 = vmatprep.subr.mxu0 0.0
        %1497 = vmatpush1.msra.mxu0 %v1028
        %1498 = vmatprep.subr.mxu0 0.0
        %1499 = vmatpush1.msra.mxu0 0.0
        %1500 = vmatprep.subr.mxu0 0.0
        %1501 = vmatpush1.msra.mxu0 0.0
        %1502 = vmatprep.subr.mxu0 0.0
        %1503 = vmatpush1.msra.mxu0 0.0
        %1504 = vmatprep.subr.mxu0 0.0
        %1505 = vmatpush1.msra.mxu0 0.0
        %1506 = vmatprep.subr.mxu0 0.0
        %1507 = vmatpush1.msra.mxu0 0.0
        %1508 = vmatprep.subr.mxu0 0.0
        %1509 = vmatpush1.msra.mxu0 0.0
        %1510 = vmatprep.subr.mxu0 0.0
        %1511 = vmatpush1.msra.mxu0 0.0
        %1512 = vmatprep.subr.mxu0 0.0
        %1513 = vmatpush1.msra.mxu0 0.0
        %1514 = vmatprep.subr.mxu0 0.0
        %1515 = vmatpush1.msra.mxu0 0.0
        %1516 = vmatprep.subr.mxu0 0.0
        %1517 = vmatpush1.msra.mxu0 0.0
        %1518 = vmatprep.subr.mxu0 0.0
        %1519 = vmatpush1.msra.mxu0 0.0
        %1520 = vmatprep.subr.mxu0 0.0
        %1521 = vmatpush1.msra.mxu0 0.0
        %1522 = vmatprep.subr.mxu0 0.0
        %1523 = vmatpush1.msra.mxu0 0.0
        %1524 = vmatprep.subr.mxu0 0.0
        %1525 = vmatpush1.msra.mxu0 0.0
        %1526 = vmatprep.subr.mxu0 0.0
        %1527 = vmatpush1.msra.mxu0 0.0
        %1528 = vmatprep.subr.mxu0 0.0
        %1529 = vmatpush1.msra.mxu0 0.0
        %1530 = vmatprep.subr.mxu0 0.0
        %1531 = vmatpush1.msra.mxu0 0.0
        %1532 = vmatprep.subr.mxu0 0.0
        %1533 = vmatpush1.msra.mxu0 0.0
        %1534 = vmatprep.subr.mxu0 0.0
        %1535 = vmatpush1.msra.mxu0 0.0
        %1536 = vmatprep.subr.mxu0 0.0
        %1537 = vmatpush1.msra.mxu0 0.0
        %1538 = vmatprep.subr.mxu0 0.0
        %1539 = vmatpush1.msra.mxu0 0.0
        %1540 = vmatprep.subr.mxu0 0.0
        %1541 = vmatpush1.msra.mxu0 0.0
        %1542 = vmatprep.subr.mxu0 0.0
        %1543 = vmatpush1.msra.mxu0 0.0
        %1544 = vmatprep.subr.mxu0 0.0
        %1545 = vmatpush1.msra.mxu0 0.0
        %1546 = vmatprep.subr.mxu0 0.0
        %1547 = vmatpush1.msra.mxu0 0.0
        %1548 = vmatprep.subr.mxu0 0.0
        %1549 = vmatpush1.msra.mxu0 0.0
        %1550 = vmatprep.subr.mxu0 0.0
        %1551 = vmatpush1.msra.mxu0 0.0
        %1552 = vmatprep.subr.mxu0 0.0
        %1553 = vmatpush1.msra.mxu0 0.0
        %1554 = vmatprep.subr.mxu0 0.0
        %1555 = vmatpush1.msra.mxu0 0.0
        %1556 = vmatprep.subr.mxu0 0.0
        %1557 = vmatpush1.msra.mxu0 0.0
        %1558 = vmatprep.subr.mxu0 0.0
        %1559 = vmatpush1.msra.mxu0 0.0
        %1560 = vmatprep.mubr.f32.mxu0 0.0
        %1561 = vmatmul.mubr.f32.gmra.mrb[0].mxu0 %v1449
        %v1562 = vpop.f32.mrb[0].mxu0
        %v1563 = vadd.f32 0.0, %v1562
        %v1564 = vpop.f32.mrb[0].mxu0
        %1565 = vmatprep.mubr.f32.mxu0 0.0
        %1566 = vmatmul.mubr.f32.gmra.mrb[0].mxu0 %v1452
        %v1567 = vpop.f32.mrb[0].mxu0
        %v1568 = vadd.f32 0.0, %v1567
        %v1569 = vpop.f32.mrb[0].mxu0
        %1570 = vmatprep.mubr.f32.mxu0 0.0
        %1571 = vmatmul.mubr.f32.gmra.mrb[0].mxu0 %v1455
        %v1572 = vpop.f32.mrb[0].mxu0
        %v1573 = vadd.f32 0.0, %v1572
        %v1574 = vpop.f32.mrb[0].mxu0
        %1575 = vmatprep.mubr.f32.mxu0 0.0
        %1576 = vmatmul.mubr.f32.gmra.mrb[0].mxu0 %v1458
        %v1577 = vpop.f32.mrb[0].mxu0
        %v1578 = vadd.f32 0.0, %v1577
        %v1579 = vpop.f32.mrb[0].mxu0
        %1580 = vmatprep.mubr.f32.mxu0 0.0
        %1581 = vmatmul.mubr.f32.gmra.mrb[0].mxu0 %v1461
        %v1582 = vpop.f32.mrb[0].mxu0
        %v1583 = vadd.f32 0.0, %v1582
        %v1584 = vpop.f32.mrb[0].mxu0
        %1585 = vmatprep.mubr.f32.mxu0 0.0
        %1586 = vmatmul.mubr.f32.gmra.mrb[0].mxu0 %v1464
        %v1587 = vpop.f32.mrb[0].mxu0
        %v1588 = vadd.f32 0.0, %v1587
        %v1589 = vpop.f32.mrb[0].mxu0
        %1590 = vmatprep.mubr.f32.mxu0 0.0
        %1591 = vmatmul.mubr.f32.gmra.mrb[0].mxu0 %v1467
        %v1592 = vpop.f32.mrb[0].mxu0
        %v1593 = vadd.f32 0.0, %v1592
        %v1594 = vpop.f32.mrb[0].mxu0
        %1595 = vmatprep.mubr.f32.mxu0 0.0
        %1596 = vmatmul.mubr.f32.gmra.mrb[0].mxu0 %v1470
        %v1597 = vpop.f32.mrb[0].mxu0
        %v1598 = vadd.f32 0.0, %v1597
        %v1599 = vpop.f32.mrb[0].mxu0
        %1600 = vmatprep.mubr.f32.mxu0 0.0
        %1601 = vmatmul.mubr.f32.gmra.mrb[0].mxu0 %v1473
        %v1602 = vpop.f32.mrb[0].mxu0
        %v1603 = vadd.f32 0.0, %v1602
        %v1604 = vpop.f32.mrb[0].mxu0
        %1605 = vmatprep.mubr.f32.mxu0 0.0
        %1606 = vmatmul.mubr.f32.gmra.mrb[0].mxu0 %v1476
        %v1607 = vpop.f32.mrb[0].mxu0
        %v1608 = vadd.f32 0.0, %v1607
        %v1609 = vpop.f32.mrb[0].mxu0
        %1610 = vmatprep.mubr.f32.mxu0 0.0
        %1611 = vmatmul.mubr.f32.gmra.mrb[0].mxu0 %v1479
        %v1612 = vpop.f32.mrb[0].mxu0
        %v1613 = vadd.f32 0.0, %v1612
        %v1614 = vpop.f32.mrb[0].mxu0
        %1615 = vmatprep.mubr.f32.mxu0 0.0
        %1616 = vmatmul.mubr.f32.gmra.mrb[0].mxu0 %v1482
        %v1617 = vpop.f32.mrb[0].mxu0
        %v1618 = vadd.f32 0.0, %v1617
        %v1619 = vpop.f32.mrb[0].mxu0
        %1620 = vmatprep.mubr.f32.mxu0 0.0
        %1621 = vmatmul.mubr.f32.gmra.mrb[0].mxu0 %v1485
        %v1622 = vpop.f32.mrb[0].mxu0
        %v1623 = vadd.f32 0.0, %v1622
        %v1624 = vpop.f32.mrb[0].mxu0
        %1625 = vmatprep.mubr.f32.mxu0 0.0
        %1626 = vmatmul.mubr.f32.gmra.mrb[0].mxu0 %v1488
        %v1627 = vpop.f32.mrb[0].mxu0
        %v1628 = vadd.f32 0.0, %v1627
        %v1629 = vpop.f32.mrb[0].mxu0
        %1630 = vmatprep.mubr.f32.mxu0 0.0
        %1631 = vmatmul.mubr.f32.gmra.mrb[0].mxu0 %v1491
        %v1632 = vpop.f32.mrb[0].mxu0
        %v1633 = vadd.f32 0.0, %v1632
        %v1634 = vpop.f32.mrb[0].mxu0
        %1635 = vmatprep.mubr.f32.mxu0 0.0
        %1636 = vmatmul.mubr.f32.gmra.mrb[0].mxu0 %v1494
        %v1637 = vpop.f32.mrb[0].mxu0
        %v1638 = vadd.f32 0.0, %v1637
        %v1639 = vpop.f32.mrb[0].mxu0
        %1640 = vdwg.mxu0
        %v1641 = vmul.f32 %v1563, %v716
        %v1642 = vmul.f32 %v1568, %v717
        %v1643 = vmul.f32 %v1573, %v718
        %v1644 = vmul.f32 %v1578, %v719
        %v1645 = vmul.f32 %v1583, %v720
        %v1646 = vmul.f32 %v1588, %v721
        %v1647 = vmul.f32 %v1593, %v722
        %v1648 = vmul.f32 %v1598, %v723
        %v1649 = vmul.f32 %v1603, %v724
        %v1650 = vmul.f32 %v1608, %v725
        %v1651 = vmul.f32 %v1613, %v726
        %v1652 = vmul.f32 %v1618, %v727
        %v1653 = vmul.f32 %v1623, %v728
        %v1654 = vmul.f32 %v1628, %v729
        %v1655 = vmul.f32 %v1633, %v730
        %v1656 = vmul.f32 %v1638, %v731
        %v1657 = vadd.f32 %v1416, %v1641
        %v1658 = vadd.f32 %v1417, %v1642
        %v1659 = vadd.f32 %v1418, %v1643
        %v1660 = vadd.f32 %v1419, %v1644
        %v1661 = vadd.f32 %v1420, %v1645
        %v1662 = vadd.f32 %v1421, %v1646
        %v1663 = vadd.f32 %v1422, %v1647
        %v1664 = vadd.f32 %v1423, %v1648
        %v1665 = vadd.f32 %v1424, %v1649
        %v1666 = vadd.f32 %v1425, %v1650
        %v1667 = vadd.f32 %v1426, %v1651
        %v1668 = vadd.f32 %v1427, %v1652
        %v1669 = vadd.f32 %v1428, %v1653
        %v1670 = vadd.f32 %v1429, %v1654
        %v1671 = vadd.f32 %v1430, %v1655
        %v1672 = vadd.f32 %v1431, %v1656
        %1673 = vst [vmem:[%s269] sm:$0xff] %v1657
        %1674 = vst [vmem:[%s269 + $0x8] sm:$0xff] %v1658
        %1675 = vst [vmem:[%s269 + $0x10] sm:$0xff] %v1659
        %1676 = vst [vmem:[%s269 + $0x18] sm:$0xff] %v1660
        %1677 = vst [vmem:[%s269 + $0x20] sm:$0xff] %v1661
        %1678 = vst [vmem:[%s269 + $0x28] sm:$0xff] %v1662
        %1679 = vst [vmem:[%s269 + $0x30] sm:$0xff] %v1663
        %1680 = vst [vmem:[%s269 + $0x38] sm:$0xff] %v1664
        %1681 = vst [vmem:[%s269 + $0x40] sm:$0xff] %v1665
        %1682 = vst [vmem:[%s269 + $0x48] sm:$0xff] %v1666
        %1683 = vst [vmem:[%s269 + $0x50] sm:$0xff] %v1667
        %1684 = vst [vmem:[%s269 + $0x58] sm:$0xff] %v1668
        %1685 = vst [vmem:[%s269 + $0x60] sm:$0xff] %v1669
        %1686 = vst [vmem:[%s269 + $0x68] sm:$0xff] %v1670
        %1687 = vst [vmem:[%s269 + $0x70] sm:$0xff] %v1671
        %1688 = vst [vmem:[%s269 + $0x78] sm:$0xff] %v1672
        %s1689 = sand.u32 %s120, 1
        %s1690 = scalar_lea.sflag [#allocation4], %s1689
        %s1691 = sand.u32 %s120, 1
        %s1692 = smul.addr %s1691, 128
        %s1693 = scalar_lea.vmem [#allocation9], %s1692
        // Predicated region
        $region49: #{tpu_custom_call.1} parent=35 // pred_check
          %p1694 = pneg %p130
        $region50: #{tpu_custom_call.1} parent=35 // pred_check_branch
          %1696 = sbr.rel (%p1694) target = $region52
        $region51: #{tpu_custom_call.1} parent=35 // pred_region
          %s1697 = smul.u32 16, %s23
          %s1699 = ssub.s32 2048, 2048
          %1700 = vsyncadd %s1690, %s1699
          %s1701 = smul.addr %s1697, 128
          %s1702 = scalar_lea.hbm %s4, %s1701
          %s1703 = sshll.u32 %s1693, 4
          %s1704 = int_to_ptr.vmem [resolvable:$true] %s1703
          %1709 = dma.vmem_to_hbm [thread:$0]  %s1704, 2048, %s1702, %s1690, 128, 128, 8
        $region52: #{tpu_custom_call.1} parent=35 // pred_fallthru
          _
      $region36: #{tpu_custom_call.1} parent=5 // pred_fallthru
        _
      %p1710 = scmp.le.s32.totalorder 2, %s18
      // Predicated region
      $region53: #{tpu_custom_call.1} parent=5 // pred_check
        %p1711 = pneg %p1710
      $region54: #{tpu_custom_call.1} parent=5 // pred_check_branch
        %1713 = sbr.rel (%p1711) target = $region56
      $region55: #{tpu_custom_call.1} parent=5 // pred_region
        %s1714 = ssub.s32 %s18, 2
        // Predicated region
        $region57: #{tpu_custom_call.1} parent=55 // pred_check
          %p1715 = pneg %p136
        $region58: #{tpu_custom_call.1} parent=55 // pred_check_branch
          %1717 = sbr.rel (%p1715) target = $region60
        $region59: #{tpu_custom_call.1} parent=55 // pred_region
          %s1718 = sand.u32 %s121, 1
          %s1719 = scalar_lea.sflag [#allocation4], %s1718
          %s1720 = sand.u32 %s121, 1
          %s1721 = smul.addr %s1720, 128
          %s1722 = scalar_lea.vmem [#allocation9], %s1721
          %1723 = dma.done %s1719, 2048
        $region60: #{tpu_custom_call.1} parent=55 // pred_fallthru
          _
      $region56: #{tpu_custom_call.1} parent=5 // pred_fallthru
        _
    $region6: #{tpu_custom_call.1} parent=1 // loop_footer
      %s22 = sadd.s32 1, %s18
    $region7: #{tpu_custom_call.1} parent=1 // loop_footer_branch
      %17 = sbr.rel target = $region3
    $region8: #{tpu_custom_call.1} parent=1 // loop_exit
      _
    %1724 = vsyncpa [#allocation3], 1
    %s1725 = scalar_lea.sflag [#allocation3], 1
    %1726 = vsyncpa %s1725, 1
    %1727 = vsyncpa [#allocation7], 1
    %1728 = vsyncpa [#allocation4], 1
    %s1729 = scalar_lea.sflag [#allocation4], 1
    %1730 = vsyncpa %s1729, 1
    %1731 = vsyncpa [#allocation5], 1
    %s1732 = scalar_lea.sflag [#allocation5], 1
    %1733 = vsyncpa %s1732, 1

</llo_original>
